<compile_context>
chip_gen: v7x
topology: tpu7x:2x2x1
jax: 0.10.0
libtpu: 0.0.40
codegen_flags: <defaults>
</compile_context>

<pallas_src>
import jax
import jax.numpy as jnp
from jax import lax
from jax.experimental import pallas as pl
from jax.experimental.pallas import tpu as pltpu

EPS = 1e-5  # nn.BatchNorm2d default


# ----------------------------------------------------------------------------
# In-kernel helpers
# ----------------------------------------------------------------------------
def _conv3x3(padded_ref, w_ref, H, W):
    """3x3 'same' conv of a zero-padded NHWC tile.

    padded_ref: (Nb, H+2, W+2, Cin) Ref (input block or VMEM scratch)
    w_ref:      (9, Cin, Cout) bf16 Ref, tap t = 3*dy + dx
    Returns f32 (Nb, H, W, Cout).
    Each tap loads its shifted window straight from the Ref (shift folded into
    the load) and does a bf16 x bf16 -> f32 MXU matmul.
    """
    Nb = padded_ref.shape[0]
    Cin = padded_ref.shape[3]
    Cout = w_ref.shape[2]
    acc = jnp.zeros((Nb * H * W, Cout), jnp.float32)
    for t in range(9):                       # static unrolled taps
        dy, dx = t // 3, t % 3
        patch = padded_ref[:, dy:dy + H, dx:dx + W, :]
        patch = patch.reshape(Nb * H * W, Cin).astype(jnp.bfloat16)
        acc = acc + lax.dot_general(
            patch, w_ref[t],
            dimension_numbers=(((1,), (0,)), ((), ())),
            preferred_element_type=jnp.float32)
    return acc.reshape(Nb, H, W, Cout)


def _channel_stats(y):
    """Per-channel (sum, sum-of-squares) partials in one traversal -> (1,2,C)."""
    C = y.shape[-1]
    f = y.reshape(-1, C)
    s = jnp.sum(f, axis=0, keepdims=True)
    ss = jnp.sum(f * f, axis=0, keepdims=True)
    return jnp.concatenate([s, ss], axis=0)[None]


# ----------------------------------------------------------------------------
# Kernels (one batch tile per grid step)
# ----------------------------------------------------------------------------
def _conv1_stats_kernel(xp_ref, w1_ref, y1_ref, st1_ref):
    # xp_ref: (Nb, H+2, W+2, C) f32   w1_ref: (9, C, C) bf16
    Nb, Hp, Wp, C = xp_ref.shape
    H, W = Hp - 2, Wp - 2
    acc = _conv3x3(xp_ref, w1_ref, H, W)
    y1_ref[...] = acc
    st1_ref[...] = _channel_stats(acc)


def _bn1_conv2_stats_kernel(y1_ref, w2_ref, sc1_ref, sh1_ref,
                            y2_ref, st2_ref, pad_ref):
    # y1_ref: (Nb, H, W, C) f32   sc1/sh1: (1,1,1,C) f32 folded BN1 scale/shift
    # pad_ref: (Nb, H+2, W+2, C) f32 VMEM scratch
    Nb, H, W, C = y1_ref.shape
    # bn1 (precomputed batch stats) + relu: single FMA + max
    a1 = jnp.maximum(y1_ref[...] * sc1_ref[...] + sh1_ref[...], 0.0)
    # Zero only the 1-element border of the scratch (cheap strips), then store
    # the interior; conv2 reads shifted windows straight from the scratch Ref.
    zrow = jnp.zeros((Nb, 1, W + 2, C), jnp.float32)
    zcol = jnp.zeros((Nb, H + 2, 1, C), jnp.float32)
    pad_ref[:, 0:1, :, :] = zrow
    pad_ref[:, H + 1:H + 2, :, :] = zrow
    pad_ref[:, :, 0:1, :] = zcol
    pad_ref[:, :, W + 1:W + 2, :] = zcol
    pad_ref[:, 1:H + 1, 1:W + 1, :] = a1
    acc = _conv3x3(pad_ref, w2_ref, H, W)
    y2_ref[...] = acc
    st2_ref[...] = _channel_stats(acc)


def _bn2_add_relu_kernel(y2_ref, x_ref, sc2_ref, sh2_ref, o_ref):
    # bn2 + residual add + relu; residual is read here only.
    y = y2_ref[...] * sc2_ref[...] + sh2_ref[...] + x_ref[...]
    o_ref[...] = jnp.maximum(y, 0.0).astype(o_ref.dtype)


# ----------------------------------------------------------------------------
# Wrapper
# ----------------------------------------------------------------------------
def _finalize_stats(partials, count):
    """Combine per-tile (sum, sumsq) partials -> (mean, rsqrt(var+eps))."""
    s = jnp.sum(partials[:, 0, :], axis=0)
    ss = jnp.sum(partials[:, 1, :], axis=0)
    mu = s / count
    var = jnp.maximum(ss / count - mu * mu, 0.0)   # biased variance
    return mu, lax.rsqrt(var + EPS)


def resblock_forward(x_nchw, params, *, batch_tile=None):
    """ResBlock forward. Input/output are NCHW float32 (PyTorch convention)."""
    w1, w2, g1, b1, g2, b2 = params            # w*: (Cout, Cin, 3, 3) torch layout
    N, C, H, W = x_nchw.shape
    if batch_tile is None:
        batch_tile = max(t for t in (8, 4, 2, 1) if N % t == 0)
    assert N % batch_tile == 0, "batch_tile must divide N"
    nb, nt = batch_tile, N // batch_tile

    # Layout glue only: NCHW -> NHWC (channels on lanes), spatial zero pad,
    # conv taps repacked to (9, Cin, Cout) and pre-cast to bf16 for the MXU.
    x = jnp.transpose(x_nchw, (0, 2, 3, 1))
    x_pad = jnp.pad(x, ((0, 0), (1, 1), (1, 1), (0, 0)))
    w1k = jnp.transpose(w1, (2, 3, 1, 0)).reshape(9, C, C).astype(jnp.bfloat16)
    w2k = jnp.transpose(w2, (2, 3, 1, 0)).reshape(9, C, C).astype(jnp.bfloat16)

    parallel = pltpu.CompilerParams(dimension_semantics=("parallel",))

    def tile4(shape):
        return pl.BlockSpec(shape, lambda i: (i, 0, 0, 0))

    def const4(shape):
        return pl.BlockSpec(shape, lambda i: (0, 0, 0, 0))

    w_spec = pl.BlockSpec((9, C, C), lambda i: (0, 0, 0))
    st_spec = pl.BlockSpec((1, 2, C), lambda i: (i, 0, 0))

    # --- pass 1: conv1 + bn1 partial stats --------------------------------
    y1, st1 = pl.pallas_call(
        _conv1_stats_kernel,
        grid=(nt,),
        in_specs=[tile4((nb, H + 2, W + 2, C)), w_spec],
        out_specs=(tile4((nb, H, W, C)), st_spec),
        out_shape=(jax.ShapeDtypeStruct((N, H, W, C), jnp.float32),
                   jax.ShapeDtypeStruct((nt, 2, C), jnp.float32)),
        compiler_params=parallel,
    )(x_pad, w1k)

    cnt = float(N * H * W)
    mu1, r1 = _finalize_stats(st1, cnt)
    sc1 = (g1 * r1).reshape(1, 1, 1, C)
    sh1 = (b1 - mu1 * g1 * r1).reshape(1, 1, 1, C)

    # --- pass 2: bn1 + relu -> conv2 + bn2 partial stats ------------------
    y2, st2 = pl.pallas_call(
        _bn1_conv2_stats_kernel,
        grid=(nt,),
        in_specs=[tile4((nb, H, W, C)), w_spec,
                  const4((1, 1, 1, C)), const4((1, 1, 1, C))],
        out_specs=(tile4((nb, H, W, C)), st_spec),
        out_shape=(jax.ShapeDtypeStruct((N, H, W, C), jnp.float32),
                   jax.ShapeDtypeStruct((nt, 2, C), jnp.float32)),
        scratch_shapes=[pltpu.VMEM((nb, H + 2, W + 2, C), jnp.float32)],
        compiler_params=parallel,
    )(y1, w2k, sc1, sh1)

    mu2, r2 = _finalize_stats(st2, cnt)
    sc2 = (g2 * r2).reshape(1, 1, 1, C)
    sh2 = (b2 - mu2 * g2 * r2).reshape(1, 1, 1, C)

    # --- pass 3: bn2 + residual + relu ------------------------------------
    out_nhwc = pl.pallas_call(
        _bn2_add_relu_kernel,
        grid=(nt,),
        in_specs=[tile4((nb, H, W, C)), tile4((nb, H, W, C)),
                  const4((1, 1, 1, C)), const4((1, 1, 1, C))],
        out_specs=tile4((nb, H, W, C)),
        out_shape=jax.ShapeDtypeStruct((N, H, W, C), x.dtype),
        compiler_params=parallel,
    )(y2, x, sc2, sh2)

    return jnp.transpose(out_nhwc, (0, 3, 1, 2))   # back to NCHW


# ----------------------------------------------------------------------------
# Pure-JAX reference (mirrors the PyTorch module in training mode)
# ----------------------------------------------------------------------------
def resblock_ref(x_nchw, params, *, conv_in_bf16=True):
    """conv_in_bf16=True rounds conv operands to bf16 (f32 accumulation) to
    mirror the kernel's native-MXU input precision; all other math is f32."""
    w1, w2, g1, b1, g2, b2 = params

    def conv(x, w):
        if conv_in_bf16:
            x, w = x.astype(jnp.bfloat16), w.astype(jnp.bfloat16)
            prec = None
        else:
            prec = lax.Precision.HIGHEST
        return lax.conv_general_dilated(
            x, w, window_strides=(1, 1), padding="SAME",
            dimension_numbers=("NCHW", "OIHW", "NCHW"),
            preferred_element_type=jnp.float32, precision=prec)

    def bn(y, g, b):
        mu = jnp.mean(y, axis=(0, 2, 3), keepdims=True)
        var = jnp.mean((y - mu) ** 2, axis=(0, 2, 3), keepdims=True)  # biased
        return (g.reshape(1, -1, 1, 1) * (y - mu) * lax.rsqrt(var + EPS)
                + b.reshape(1, -1, 1, 1))

    out = jnp.maximum(bn(conv(x_nchw, w1), g1, b1), 0.0)
    out = bn(conv(out, w2), g2, b2)
    return jnp.maximum(out + x_nchw, 0.0)


if __name__ == "__main__":
    key = jax.random.PRNGKey(0)
    # Chess-board spatial (8x8); C=128 keeps the lane axis dense while staying
    # small (module default is 256); batch 4 tiled by 2 exercises the grid.
    N, C, H, W = 4, 128, 8, 8
    ks = jax.random.split(key, 7)

    x = jax.random.normal(ks[0], (N, C, H, W), jnp.float32)
    w1 = 0.1 * jax.random.normal(ks[1], (C, C, 3, 3), jnp.float32)
    w2 = 0.1 * jax.random.normal(ks[2], (C, C, 3, 3), jnp.float32)
    g1 = 1.0 + 0.1 * jax.random.normal(ks[3], (C,), jnp.float32)
    b1 = 0.1 * jax.random.normal(ks[4], (C,), jnp.float32)
    g2 = 1.0 + 0.1 * jax.random.normal(ks[5], (C,), jnp.float32)
    b2 = 0.1 * jax.random.normal(ks[6], (C,), jnp.float32)
    params = (w1, w2, g1, b1, g2, b2)

    out = jax.block_until_ready(resblock_forward(x, params, batch_tile=2))
    ref_bf = jax.block_until_ready(resblock_ref(x, params, conv_in_bf16=True))
    ref_f32 = jax.block_until_ready(resblock_ref(x, params, conv_in_bf16=False))

    assert out.shape == x.shape and out.dtype == x.dtype
    err_bf = float(jnp.max(jnp.abs(out - ref_bf)))
    assert jnp.allclose(out, ref_bf, atol=2e-3, rtol=2e-3), f"max_err={err_bf}"
    # Loose sanity bound vs full-f32 math (covers intentional bf16 MXU rounding).
    err_f32 = float(jnp.max(jnp.abs(out - ref_f32)))
    assert err_f32 < 0.1, f"f32-ref max_err={err_f32}"
    print("KERNEL_OK")
</pallas_src>

<mosaic_0001>
module attributes {stable_mosaic.version = 11 : i64} {
  func.func @_conv1_stats_kernel(%arg0: i32, %arg1: memref<2x10x10x128xf32, #tpu.memory_space<vmem>>, %arg2: memref<9x128x128xbf16, #tpu.memory_space<vmem>>, %arg3: memref<2x8x8x128xf32, #tpu.memory_space<vmem>>, %arg4: memref<1x2x128xf32, #tpu.memory_space<vmem>>) attributes {dimension_semantics = [#tpu.dimension_semantics<parallel>], iteration_bounds = array<i64: 2>, scalar_prefetch = 0 : i64, scratch_operands = 0 : i64, tpu.core_type = #tpu.core_type<tc>, window_params = [{transform_indices = @transform_0, window_bounds = array<i64: 2, 10, 10, 128>}, {pipeline_mode = #tpu.pipeline_mode<synchronous>, transform_indices = @transform_1, window_bounds = array<i64: 9, 128, 128>}, {transform_indices = @transform_2, window_bounds = array<i64: 2, 8, 8, 128>}, {transform_indices = @transform_3, window_bounds = array<i64: 1, 2, 128>}]} {
    %cst = arith.constant 0.000000e+00 : f32
    %0 = vector.broadcast %cst : f32 to vector<128x128xf32>
    %c0 = arith.constant 0 : index
    %c0_0 = arith.constant 0 : index
    %c0_1 = arith.constant 0 : index
    %c0_2 = arith.constant 0 : index
    %1 = vector.load %arg1[%c0, %c0_0, %c0_1, %c0_2] : memref<2x10x10x128xf32, #tpu.memory_space<vmem>>, vector<2x8x8x128xf32>
    %2 = vector.shape_cast %1 : vector<2x8x8x128xf32> to vector<128x128xf32>
    %3 = arith.truncf %2 : vector<128x128xf32> to vector<128x128xbf16>
    %c0_3 = arith.constant 0 : index
    %c0_4 = arith.constant 0 : index
    %c0_5 = arith.constant 0 : index
    %4 = vector.load %arg2[%c0_3, %c0_4, %c0_5] : memref<9x128x128xbf16, #tpu.memory_space<vmem>>, vector<1x128x128xbf16>
    %5 = vector.shape_cast %4 : vector<1x128x128xbf16> to vector<128x128xbf16>
    %cst_6 = arith.constant dense<0.000000e+00> : vector<128x128xf32>
    %6 = tpu.matmul %3, %5, %cst_6 {dimension_numbers = #tpu.dot_dimension_numbers<[1], [0], [0], [1], [0, 0, 1, 1], [], []>} : vector<128x128xbf16>, vector<128x128xbf16>, vector<128x128xf32> -> vector<128x128xf32>
    %7 = arith.addf %0, %6 : vector<128x128xf32>
    %c0_7 = arith.constant 0 : index
    %c0_8 = arith.constant 0 : index
    %c1 = arith.constant 1 : index
    %c0_9 = arith.constant 0 : index
    %8 = vector.load %arg1[%c0_7, %c0_8, %c1, %c0_9] : memref<2x10x10x128xf32, #tpu.memory_space<vmem>>, vector<2x8x8x128xf32>
    %9 = vector.shape_cast %8 : vector<2x8x8x128xf32> to vector<128x128xf32>
    %10 = arith.truncf %9 : vector<128x128xf32> to vector<128x128xbf16>
    %c1_10 = arith.constant 1 : index
    %c0_11 = arith.constant 0 : index
    %c0_12 = arith.constant 0 : index
    %11 = vector.load %arg2[%c1_10, %c0_11, %c0_12] : memref<9x128x128xbf16, #tpu.memory_space<vmem>>, vector<1x128x128xbf16>
    %12 = vector.shape_cast %11 : vector<1x128x128xbf16> to vector<128x128xbf16>
    %cst_13 = arith.constant dense<0.000000e+00> : vector<128x128xf32>
    %13 = tpu.matmul %10, %12, %cst_13 {dimension_numbers = #tpu.dot_dimension_numbers<[1], [0], [0], [1], [0, 0, 1, 1], [], []>} : vector<128x128xbf16>, vector<128x128xbf16>, vector<128x128xf32> -> vector<128x128xf32>
    %14 = arith.addf %7, %13 : vector<128x128xf32>
    %c0_14 = arith.constant 0 : index
    %c0_15 = arith.constant 0 : index
    %c2 = arith.constant 2 : index
    %c0_16 = arith.constant 0 : index
    %15 = vector.load %arg1[%c0_14, %c0_15, %c2, %c0_16] : memref<2x10x10x128xf32, #tpu.memory_space<vmem>>, vector<2x8x8x128xf32>
    %16 = vector.shape_cast %15 : vector<2x8x8x128xf32> to vector<128x128xf32>
    %17 = arith.truncf %16 : vector<128x128xf32> to vector<128x128xbf16>
    %c2_17 = arith.constant 2 : index
    %c0_18 = arith.constant 0 : index
    %c0_19 = arith.constant 0 : index
    %18 = vector.load %arg2[%c2_17, %c0_18, %c0_19] : memref<9x128x128xbf16, #tpu.memory_space<vmem>>, vector<1x128x128xbf16>
    %19 = vector.shape_cast %18 : vector<1x128x128xbf16> to vector<128x128xbf16>
    %cst_20 = arith.constant dense<0.000000e+00> : vector<128x128xf32>
    %20 = tpu.matmul %17, %19, %cst_20 {dimension_numbers = #tpu.dot_dimension_numbers<[1], [0], [0], [1], [0, 0, 1, 1], [], []>} : vector<128x128xbf16>, vector<128x128xbf16>, vector<128x128xf32> -> vector<128x128xf32>
    %21 = arith.addf %14, %20 : vector<128x128xf32>
    %c0_21 = arith.constant 0 : index
    %c1_22 = arith.constant 1 : index
    %c0_23 = arith.constant 0 : index
    %c0_24 = arith.constant 0 : index
    %22 = vector.load %arg1[%c0_21, %c1_22, %c0_23, %c0_24] : memref<2x10x10x128xf32, #tpu.memory_space<vmem>>, vector<2x8x8x128xf32>
    %23 = vector.shape_cast %22 : vector<2x8x8x128xf32> to vector<128x128xf32>
    %24 = arith.truncf %23 : vector<128x128xf32> to vector<128x128xbf16>
    %c3 = arith.constant 3 : index
    %c0_25 = arith.constant 0 : index
    %c0_26 = arith.constant 0 : index
    %25 = vector.load %arg2[%c3, %c0_25, %c0_26] : memref<9x128x128xbf16, #tpu.memory_space<vmem>>, vector<1x128x128xbf16>
    %26 = vector.shape_cast %25 : vector<1x128x128xbf16> to vector<128x128xbf16>
    %cst_27 = arith.constant dense<0.000000e+00> : vector<128x128xf32>
    %27 = tpu.matmul %24, %26, %cst_27 {dimension_numbers = #tpu.dot_dimension_numbers<[1], [0], [0], [1], [0, 0, 1, 1], [], []>} : vector<128x128xbf16>, vector<128x128xbf16>, vector<128x128xf32> -> vector<128x128xf32>
    %28 = arith.addf %21, %27 : vector<128x128xf32>
    %c0_28 = arith.constant 0 : index
    %c1_29 = arith.constant 1 : index
    %c1_30 = arith.constant 1 : index
    %c0_31 = arith.constant 0 : index
    %29 = vector.load %arg1[%c0_28, %c1_29, %c1_30, %c0_31] : memref<2x10x10x128xf32, #tpu.memory_space<vmem>>, vector<2x8x8x128xf32>
    %30 = vector.shape_cast %29 : vector<2x8x8x128xf32> to vector<128x128xf32>
    %31 = arith.truncf %30 : vector<128x128xf32> to vector<128x128xbf16>
    %c4 = arith.constant 4 : index
    %c0_32 = arith.constant 0 : index
    %c0_33 = arith.constant 0 : index
    %32 = vector.load %arg2[%c4, %c0_32, %c0_33] : memref<9x128x128xbf16, #tpu.memory_space<vmem>>, vector<1x128x128xbf16>
    %33 = vector.shape_cast %32 : vector<1x128x128xbf16> to vector<128x128xbf16>
    %cst_34 = arith.constant dense<0.000000e+00> : vector<128x128xf32>
    %34 = tpu.matmul %31, %33, %cst_34 {dimension_numbers = #tpu.dot_dimension_numbers<[1], [0], [0], [1], [0, 0, 1, 1], [], []>} : vector<128x128xbf16>, vector<128x128xbf16>, vector<128x128xf32> -> vector<128x128xf32>
    %35 = arith.addf %28, %34 : vector<128x128xf32>
    %c0_35 = arith.constant 0 : index
    %c1_36 = arith.constant 1 : index
    %c2_37 = arith.constant 2 : index
    %c0_38 = arith.constant 0 : index
    %36 = vector.load %arg1[%c0_35, %c1_36, %c2_37, %c0_38] : memref<2x10x10x128xf32, #tpu.memory_space<vmem>>, vector<2x8x8x128xf32>
    %37 = vector.shape_cast %36 : vector<2x8x8x128xf32> to vector<128x128xf32>
    %38 = arith.truncf %37 : vector<128x128xf32> to vector<128x128xbf16>
    %c5 = arith.constant 5 : index
    %c0_39 = arith.constant 0 : index
    %c0_40 = arith.constant 0 : index
    %39 = vector.load %arg2[%c5, %c0_39, %c0_40] : memref<9x128x128xbf16, #tpu.memory_space<vmem>>, vector<1x128x128xbf16>
    %40 = vector.shape_cast %39 : vector<1x128x128xbf16> to vector<128x128xbf16>
    %cst_41 = arith.constant dense<0.000000e+00> : vector<128x128xf32>
    %41 = tpu.matmul %38, %40, %cst_41 {dimension_numbers = #tpu.dot_dimension_numbers<[1], [0], [0], [1], [0, 0, 1, 1], [], []>} : vector<128x128xbf16>, vector<128x128xbf16>, vector<128x128xf32> -> vector<128x128xf32>
    %42 = arith.addf %35, %41 : vector<128x128xf32>
    %c0_42 = arith.constant 0 : index
    %c2_43 = arith.constant 2 : index
    %c0_44 = arith.constant 0 : index
    %c0_45 = arith.constant 0 : index
    %43 = vector.load %arg1[%c0_42, %c2_43, %c0_44, %c0_45] : memref<2x10x10x128xf32, #tpu.memory_space<vmem>>, vector<2x8x8x128xf32>
    %44 = vector.shape_cast %43 : vector<2x8x8x128xf32> to vector<128x128xf32>
    %45 = arith.truncf %44 : vector<128x128xf32> to vector<128x128xbf16>
    %c6 = arith.constant 6 : index
    %c0_46 = arith.constant 0 : index
    %c0_47 = arith.constant 0 : index
    %46 = vector.load %arg2[%c6, %c0_46, %c0_47] : memref<9x128x128xbf16, #tpu.memory_space<vmem>>, vector<1x128x128xbf16>
    %47 = vector.shape_cast %46 : vector<1x128x128xbf16> to vector<128x128xbf16>
    %cst_48 = arith.constant dense<0.000000e+00> : vector<128x128xf32>
    %48 = tpu.matmul %45, %47, %cst_48 {dimension_numbers = #tpu.dot_dimension_numbers<[1], [0], [0], [1], [0, 0, 1, 1], [], []>} : vector<128x128xbf16>, vector<128x128xbf16>, vector<128x128xf32> -> vector<128x128xf32>
    %49 = arith.addf %42, %48 : vector<128x128xf32>
    %c0_49 = arith.constant 0 : index
    %c2_50 = arith.constant 2 : index
    %c1_51 = arith.constant 1 : index
    %c0_52 = arith.constant 0 : index
    %50 = vector.load %arg1[%c0_49, %c2_50, %c1_51, %c0_52] : memref<2x10x10x128xf32, #tpu.memory_space<vmem>>, vector<2x8x8x128xf32>
    %51 = vector.shape_cast %50 : vector<2x8x8x128xf32> to vector<128x128xf32>
    %52 = arith.truncf %51 : vector<128x128xf32> to vector<128x128xbf16>
    %c7 = arith.constant 7 : index
    %c0_53 = arith.constant 0 : index
    %c0_54 = arith.constant 0 : index
    %53 = vector.load %arg2[%c7, %c0_53, %c0_54] : memref<9x128x128xbf16, #tpu.memory_space<vmem>>, vector<1x128x128xbf16>
    %54 = vector.shape_cast %53 : vector<1x128x128xbf16> to vector<128x128xbf16>
    %cst_55 = arith.constant dense<0.000000e+00> : vector<128x128xf32>
    %55 = tpu.matmul %52, %54, %cst_55 {dimension_numbers = #tpu.dot_dimension_numbers<[1], [0], [0], [1], [0, 0, 1, 1], [], []>} : vector<128x128xbf16>, vector<128x128xbf16>, vector<128x128xf32> -> vector<128x128xf32>
    %56 = arith.addf %49, %55 : vector<128x128xf32>
    %c0_56 = arith.constant 0 : index
    %c2_57 = arith.constant 2 : index
    %c2_58 = arith.constant 2 : index
    %c0_59 = arith.constant 0 : index
    %57 = vector.load %arg1[%c0_56, %c2_57, %c2_58, %c0_59] : memref<2x10x10x128xf32, #tpu.memory_space<vmem>>, vector<2x8x8x128xf32>
    %58 = vector.shape_cast %57 : vector<2x8x8x128xf32> to vector<128x128xf32>
    %59 = arith.truncf %58 : vector<128x128xf32> to vector<128x128xbf16>
    %c8 = arith.constant 8 : index
    %c0_60 = arith.constant 0 : index
    %c0_61 = arith.constant 0 : index
    %60 = vector.load %arg2[%c8, %c0_60, %c0_61] : memref<9x128x128xbf16, #tpu.memory_space<vmem>>, vector<1x128x128xbf16>
    %61 = vector.shape_cast %60 : vector<1x128x128xbf16> to vector<128x128xbf16>
    %cst_62 = arith.constant dense<0.000000e+00> : vector<128x128xf32>
    %62 = tpu.matmul %59, %61, %cst_62 {dimension_numbers = #tpu.dot_dimension_numbers<[1], [0], [0], [1], [0, 0, 1, 1], [], []>} : vector<128x128xbf16>, vector<128x128xbf16>, vector<128x128xf32> -> vector<128x128xf32>
    %63 = arith.addf %56, %62 : vector<128x128xf32>
    %64 = vector.shape_cast %63 : vector<128x128xf32> to vector<2x8x8x128xf32>
    %c0_63 = arith.constant 0 : index
    %c0_64 = arith.constant 0 : index
    %c0_65 = arith.constant 0 : index
    %c0_66 = arith.constant 0 : index
    %65 = vector.load %arg3[%c0_63, %c0_64, %c0_65, %c0_66] : memref<2x8x8x128xf32, #tpu.memory_space<vmem>>, vector<2x8x8x128xf32>
    tpu.vector_store %arg3[%c0_63, %c0_64, %c0_65, %c0_66], %64 {strides = array<i32>} : memref<2x8x8x128xf32, #tpu.memory_space<vmem>>, vector<2x8x8x128xf32>,
    %66 = vector.shape_cast %64 : vector<2x8x8x128xf32> to vector<128x128xf32>
    %cst_67 = arith.constant dense<0.000000e+00> : vector<128xf32>
    %67 = vector.multi_reduction <add>, %66, %cst_67 [0] : vector<128x128xf32> to vector<128xf32>
    %68 = vector.shape_cast %67 : vector<128xf32> to vector<1x128xf32>
    %69 = arith.mulf %66, %66 : vector<128x128xf32>
    %cst_68 = arith.constant dense<0.000000e+00> : vector<128xf32>
    %70 = vector.multi_reduction <add>, %69, %cst_68 [0] : vector<128x128xf32> to vector<128xf32>
    %71 = vector.shape_cast %70 : vector<128xf32> to vector<1x128xf32>
    %72 = tpu.concatenate %68, %71 in 0 : vector<1x128xf32>, vector<1x128xf32> -> vector<2x128xf32>
    %73 = vector.shape_cast %72 : vector<2x128xf32> to vector<1x2x128xf32>
    %c0_69 = arith.constant 0 : index
    %c0_70 = arith.constant 0 : index
    %c0_71 = arith.constant 0 : index
    %74 = vector.load %arg4[%c0_69, %c0_70, %c0_71] : memref<1x2x128xf32, #tpu.memory_space<vmem>>, vector<1x2x128xf32>
    tpu.vector_store %arg4[%c0_69, %c0_70, %c0_71], %73 {strides = array<i32>} : memref<1x2x128xf32, #tpu.memory_space<vmem>>, vector<1x2x128xf32>,
    return
  }
  func.func @transform_0(%arg0: i32) -> (i32, i32, i32, i32) {
    %c0_i32 = arith.constant 0 : i32
    %c0_i32_0 = arith.constant 0 : i32
    %c0_i32_1 = arith.constant 0 : i32
    %c0_i32_2 = arith.constant 0 : i32
    return %arg0, %c0_i32, %c0_i32_0, %c0_i32_1 : i32, i32, i32, i32
  }
  func.func @transform_1(%arg0: i32) -> (i32, i32, i32) {
    %c0_i32 = arith.constant 0 : i32
    %c0_i32_0 = arith.constant 0 : i32
    %c0_i32_1 = arith.constant 0 : i32
    %c0_i32_2 = arith.constant 0 : i32
    return %c0_i32, %c0_i32_0, %c0_i32_1 : i32, i32, i32
  }
  func.func @transform_2(%arg0: i32) -> (i32, i32, i32, i32) {
    %c0_i32 = arith.constant 0 : i32
    %c0_i32_0 = arith.constant 0 : i32
    %c0_i32_1 = arith.constant 0 : i32
    %c0_i32_2 = arith.constant 0 : i32
    return %arg0, %c0_i32, %c0_i32_0, %c0_i32_1 : i32, i32, i32, i32
  }
  func.func @transform_3(%arg0: i32) -> (i32, i32, i32) {
    %c0_i32 = arith.constant 0 : i32
    %c0_i32_0 = arith.constant 0 : i32
    %c0_i32_1 = arith.constant 0 : i32
    return %arg0, %c0_i32, %c0_i32_0 : i32, i32, i32
  }
}

</mosaic_0001>

<llo_original>
// kernel: tpu_custom_call.1
$region0: #{tpu_custom_call.1}
  #allocation0 [shape = 'u32[]', space=smem, size = 0x4, offset = 0x4, fixed_abs, tag = 'smem constant byte address 0x4 - core index']
  #allocation1 [shape = 'u32[144,128]{1,0:T(1,128)}', space=vmem, size = 0x12000, scoped, tag = 'internal scratch']
  %s0 = inlined_call_operand.vmem [shape: f32[4,10,10,128], index: 0, kind: input, shape index: {}]
  %s1 = inlined_call_operand.vmem [shape: bf16[9,128,128], index: 1, kind: input, shape index: {}]
  %s2 = inlined_call_operand.hbm [shape: f32[4,8,8,128], index: 2, kind: output, shape index: {0}]
  %s3 = inlined_call_operand.hbm [shape: f32[2,2,128], index: 3, kind: output, shape index: {1}]
  %4 = xla_tuple %s2, %s3
  %s5 = sld [smem:[#allocation0]]
  $region49: #{tpu_custom_call.1} parent=0
    _
  %s7 = ssub.s32 1, %s5
  %s8 = scalar_select 0, %s7, %s5
  $region1: #{tpu_custom_call.1} parent=0
    #allocation2 [shape = 'u8[131072]{0}', space=vmem, size = 0x20000, scoped, tag = 'output window, operand 0']
    #allocation3 [shape = 's32[2]{0}', space=sflag, size = 0x8, scoped, tag = 'scoped memory for tpu_custom_call.1']
    #allocation4 [shape = 'u8[2048]{0}', space=vmem, size = 0x800, scoped, tag = 'output window, operand 1']
    #allocation5 [shape = 's32[2]{0}', space=sflag, size = 0x8, scoped, tag = 'scoped memory for tpu_custom_call.1']
    %9 = vsyncpa [#allocation3], 0
    %s10 = scalar_lea.sflag [#allocation3], 1
    %11 = vsyncpa %s10, 0
    %12 = vsyncpa [#allocation5], 0
    %s13 = scalar_lea.sflag [#allocation5], 1
    %14 = vsyncpa %s13, 0
    loop: start=0, step=1, limit=4
    $region2: #{tpu_custom_call.1} parent=1 // loop_pre_header
      _
    $region3: #{tpu_custom_call.1} parent=1 // loop_header
      %s16 = sphi 0, %s20
      %p17 = scmp.ge.s32.totalorder %s16, 4
      %s26 = sphi 0, %s28
      %s29 = sphi 0, %s26
      %s30 = sphi 0, %s29
      %s46 = sphi 0, %s30
      %s50 = sphi 0, %s50
      %s52 = sphi 0, %s50
      %s53 = sphi 0, %s52
      %s67 = sphi 0, %s53
      %s73 = sphi 0, %s75
      %s76 = sphi 0, %s73
      %s77 = sphi 0, %s76
      %s93 = sphi 0, %s77
      %s99 = sphi 0, %s101
      %s102 = sphi 0, %s99
      %s103 = sphi 0, %s102
      %s119 = sphi 0, %s103
    $region4: #{tpu_custom_call.1} parent=1 // loop_header_branch
      %19 = sbr.rel (%p17) target = $region8
    $region5: #{tpu_custom_call.1} parent=1 // loop_body
      %s21 = ssub.s32 %s16, 1
      %s22 = ssub.s32 %s16, 2
      %s23 = sadd.s32 %s16, 1
      %s24 = ssub.s32 %s16, %s23
      %p25 = scmp.eq.s32.totalorder %s24, 0
      %s27 = sadd.s32 %s26, 1
      %s28 = scalar_select %p25, %s26, %s27
      %p31 = pneg %p25
      %p32 = scmp.eq.s32.totalorder %s16, 1
      %p33 = por %p31, %p32
      %p34 = scmp.ne.s32.totalorder %s26, %s29
      %p35 = scmp.eq.s32.totalorder %s16, 0
      %p36 = por %p34, %p35
      %p37 = scmp.ne.s32.totalorder %s26, %s29
      %p38 = scmp.eq.s32.totalorder %s21, 1
      %p39 = por %p37, %p38
      %p40 = scmp.ne.s32.totalorder %s29, %s30
      %p41 = scmp.eq.s32.totalorder %s21, 0
      %p42 = por %p40, %p41
      %p43 = scmp.ne.s32.totalorder %s29, %s30
      %p44 = scmp.eq.s32.totalorder %s22, 1
      %p45 = por %p43, %p44
      %p47 = scmp.ne.s32.totalorder %s30, %s46
      %p48 = scmp.eq.s32.totalorder %s22, 0
      %p49 = por %p47, %p48
      %s51 = sadd.s32 %s50, 1
      %p54 = scmp.eq.s32.totalorder %s16, 1
      %p55 = scmp.ne.s32.totalorder %s50, %s52
      %p56 = scmp.eq.s32.totalorder %s16, 0
      %p57 = por %p55, %p56
      %p58 = scmp.ne.s32.totalorder %s50, %s52
      %p59 = scmp.eq.s32.totalorder %s21, 1
      %p60 = por %p58, %p59
      %p61 = scmp.ne.s32.totalorder %s52, %s53
      %p62 = scmp.eq.s32.totalorder %s21, 0
      %p63 = por %p61, %p62
      %p64 = scmp.ne.s32.totalorder %s52, %s53
      %p65 = scmp.eq.s32.totalorder %s22, 1
      %p66 = por %p64, %p65
      %p68 = scmp.ne.s32.totalorder %s53, %s67
      %p69 = scmp.eq.s32.totalorder %s22, 0
      %p70 = por %p68, %p69
      %s71 = ssub.s32 %s16, %s23
      %p72 = scmp.eq.s32.totalorder %s71, 0
      %s74 = sadd.s32 %s73, 1
      %s75 = scalar_select %p72, %s73, %s74
      %p78 = pneg %p72
      %p79 = scmp.eq.s32.totalorder %s16, 1
      %p80 = por %p78, %p79
      %p81 = scmp.ne.s32.totalorder %s73, %s76
      %p82 = scmp.eq.s32.totalorder %s16, 0
      %p83 = por %p81, %p82
      %p84 = scmp.ne.s32.totalorder %s73, %s76
      %p85 = scmp.eq.s32.totalorder %s21, 1
      %p86 = por %p84, %p85
      %p87 = scmp.ne.s32.totalorder %s76, %s77
      %p88 = scmp.eq.s32.totalorder %s21, 0
      %p89 = por %p87, %p88
      %p90 = scmp.ne.s32.totalorder %s76, %s77
      %p91 = scmp.eq.s32.totalorder %s22, 1
      %p92 = por %p90, %p91
      %p94 = scmp.ne.s32.totalorder %s77, %s93
      %p95 = scmp.eq.s32.totalorder %s22, 0
      %p96 = por %p94, %p95
      %s97 = ssub.s32 %s16, %s23
      %p98 = scmp.eq.s32.totalorder %s97, 0
      %s100 = sadd.s32 %s99, 1
      %s101 = scalar_select %p98, %s99, %s100
      %p104 = pneg %p98
      %p105 = scmp.eq.s32.totalorder %s16, 1
      %p106 = por %p104, %p105
      %p107 = scmp.ne.s32.totalorder %s99, %s102
      %p108 = scmp.eq.s32.totalorder %s16, 0
      %p109 = por %p107, %p108
      %p110 = scmp.ne.s32.totalorder %s99, %s102
      %p111 = scmp.eq.s32.totalorder %s21, 1
      %p112 = por %p110, %p111
      %p113 = scmp.ne.s32.totalorder %s102, %s103
      %p114 = scmp.eq.s32.totalorder %s21, 0
      %p115 = por %p113, %p114
      %p116 = scmp.ne.s32.totalorder %s102, %s103
      %p117 = scmp.eq.s32.totalorder %s22, 1
      %p118 = por %p116, %p117
      %p120 = scmp.ne.s32.totalorder %s103, %s119
      %p121 = scmp.eq.s32.totalorder %s22, 0
      %p122 = por %p120, %p121
      %p123 = scmp.le.s32.totalorder 1, %s16
      %p124 = scmp.lt.s32.totalorder %s16, 3
      %p125 = pnand %p123, %p124
      %p126 = pneg %p125
      // Predicated region
      $region9: #{tpu_custom_call.1} parent=5 // pred_check
        _
      $region10: #{tpu_custom_call.1} parent=5 // pred_check_branch
        %128 = sbr.rel (%p125) target = $region12
      $region11: #{tpu_custom_call.1} parent=5 // pred_region
        %s129 = ssub.s32 %s16, 1
        // Predicated region
        $region13: #{tpu_custom_call.1} parent=11 // pred_check
          %p130 = pneg %p63
        $region14: #{tpu_custom_call.1} parent=11 // pred_check_branch
          %132 = sbr.rel (%p130) target = $region16
        $region15: #{tpu_custom_call.1} parent=11 // pred_region
          _
        $region16: #{tpu_custom_call.1} parent=11 // pred_fallthru
          _
      $region12: #{tpu_custom_call.1} parent=5 // pred_fallthru
        _
      %p133 = scmp.lt.s32.totalorder %s16, 2
      // Predicated region
      $region17: #{tpu_custom_call.1} parent=5 // pred_check
        %p134 = pneg %p133
      $region18: #{tpu_custom_call.1} parent=5 // pred_check_branch
        %136 = sbr.rel (%p134) target = $region20
      $region19: #{tpu_custom_call.1} parent=5 // pred_region
        // Predicated region
        $region21: #{tpu_custom_call.1} parent=19 // pred_check
          %p137 = pneg %p36
        $region22: #{tpu_custom_call.1} parent=19 // pred_check_branch
          %139 = sbr.rel (%p137) target = $region24
        $region23: #{tpu_custom_call.1} parent=19 // pred_region
          %s140 = smul.u32 2, %s16
          %p141 = scmp.lt.s32.totalorder %s140, 3
          %s142 = scalar_select %p141, %s140, 3
          %s143 = smul.addr %s142, 20
          %s144 = smul.addr %s143, 8
          %s145 = scalar_lea.vmem %s0, %s144
          %s146 = smul.u32 2, %s16
        $region24: #{tpu_custom_call.1} parent=19 // pred_fallthru
          _
      $region20: #{tpu_custom_call.1} parent=5 // pred_fallthru
        _
      %p147 = scmp.le.s32.totalorder 1, %s16
      %p148 = scmp.lt.s32.totalorder %s16, 3
      %p149 = pnand %p147, %p148
      %p150 = pneg %p149
      // Predicated region
      $region25: #{tpu_custom_call.1} parent=5 // pred_check
        _
      $region26: #{tpu_custom_call.1} parent=5 // pred_check_branch
        %152 = sbr.rel (%p149) target = $region28
      $region27: #{tpu_custom_call.1} parent=5 // pred_region
        %s153 = ssub.s32 %s16, 1
        %s154 = smul.u32 2, %s21
        %p155 = scmp.lt.s32.totalorder %s154, 3
        %s156 = scalar_select %p155, %s154, 3
        %s157 = smul.addr %s156, 20
        %s158 = smul.addr %s157, 8
        %s159 = scalar_lea.vmem %s0, %s158
        %p160 = pneg %p42
        %p161 = pneg %p39
        %p162 = pneg %p63
        %p163 = pneg %p60
        %p164 = pneg %p89
        %p165 = pneg %p86
        %s166 = sand.u32 %s76, 1
        %s167 = scalar_lea.sflag [#allocation3], %s166
        %s168 = sand.u32 %s76, 1
        %s169 = smul.addr %s168, 128
        %s170 = scalar_lea.vmem [#allocation2], %s169
        %p171 = pneg %p115
        %p172 = pneg %p112
        %s173 = sand.u32 %s102, 1
        %s174 = scalar_lea.sflag [#allocation5], %s173
        %s175 = sand.u32 %s102, 1
        %s176 = smul.addr %s175, 2
        %s177 = scalar_lea.vmem [#allocation4], %s176
        %s178 = smul.u32 2, %s21
        %p179 = scmp.lt.s32.totalorder %s178, 3
        %s180 = scalar_select %p179, %s178, 3
        %s181 = smul.addr %s180, 20
        %s182 = smul.addr %s181, 8
        %s183 = scalar_lea.vmem %s0, %s182
        %s184 = smul.u32 2, %s21
        %s185 = smul.u32 2, %s21
        %v187 = vld [vmem:[%s183] sm:$0xff]
        %v188 = vld [vmem:[%s183 + $0x10] sm:$0xff]
        %v189 = vld [vmem:[%s183 + $0x20] sm:$0xff]
        %v190 = vld [vmem:[%s183 + $0x30] sm:$0xff]
        %v191 = vld [vmem:[%s183 + $0x40] sm:$0xff]
        %v192 = vld [vmem:[%s183 + $0x50] sm:$0xff]
        %v193 = vld [vmem:[%s183 + $0x60] sm:$0xff]
        %v194 = vld [vmem:[%s183 + $0x70] sm:$0xff]
        %v195 = vld [vmem:[%s183 + $0xa0] sm:$0xff]
        %v196 = vld [vmem:[%s183 + $0xb0] sm:$0xff]
        %v197 = vld [vmem:[%s183 + $0xc0] sm:$0xff]
        %v198 = vld [vmem:[%s183 + $0xd0] sm:$0xff]
        %v199 = vld [vmem:[%s183 + $0xe0] sm:$0xff]
        %v200 = vld [vmem:[%s183 + $0xf0] sm:$0xff]
        %v201 = vld [vmem:[%s183 + $0x100] sm:$0xff]
        %v202 = vld [vmem:[%s183 + $0x110] sm:$0xff]
        %v203 = vpack.c.bf16 %v188, %v187
        %v204 = vpack.c.bf16 %v190, %v189
        %v205 = vpack.c.bf16 %v192, %v191
        %v206 = vpack.c.bf16 %v194, %v193
        %v207 = vpack.c.bf16 %v196, %v195
        %v208 = vpack.c.bf16 %v198, %v197
        %v209 = vpack.c.bf16 %v200, %v199
        %v210 = vpack.c.bf16 %v202, %v201
        %v211 = vld [vmem:[%s1] sm:$0xf]
        %v212 = vld [vmem:[%s1 + $0x4] sm:$0xf]
        %v213 = vld [vmem:[%s1 + $0x8] sm:$0xf]
        %v214 = vld [vmem:[%s1 + $0xc] sm:$0xf]
        %v215 = vld [vmem:[%s1 + $0x10] sm:$0xf]
        %v216 = vld [vmem:[%s1 + $0x14] sm:$0xf]
        %v217 = vld [vmem:[%s1 + $0x18] sm:$0xf]
        %v218 = vld [vmem:[%s1 + $0x1c] sm:$0xf]
        %v219 = vld [vmem:[%s1 + $0x20] sm:$0xf]
        %v220 = vld [vmem:[%s1 + $0x24] sm:$0xf]
        %v221 = vld [vmem:[%s1 + $0x28] sm:$0xf]
        %v222 = vld [vmem:[%s1 + $0x2c] sm:$0xf]
        %v223 = vld [vmem:[%s1 + $0x30] sm:$0xf]
        %v224 = vld [vmem:[%s1 + $0x34] sm:$0xf]
        %v225 = vld [vmem:[%s1 + $0x38] sm:$0xf]
        %v226 = vld [vmem:[%s1 + $0x3c] sm:$0xf]
        %v227 = vld [vmem:[%s183 + $0x1] sm:$0xff]
        %v228 = vld [vmem:[%s183 + $0x11] sm:$0xff]
        %v229 = vld [vmem:[%s183 + $0x21] sm:$0xff]
        %v230 = vld [vmem:[%s183 + $0x31] sm:$0xff]
        %v231 = vld [vmem:[%s183 + $0x41] sm:$0xff]
        %v232 = vld [vmem:[%s183 + $0x51] sm:$0xff]
        %v233 = vld [vmem:[%s183 + $0x61] sm:$0xff]
        %v234 = vld [vmem:[%s183 + $0x71] sm:$0xff]
        %v235 = vld [vmem:[%s183 + $0xa1] sm:$0xff]
        %v236 = vld [vmem:[%s183 + $0xb1] sm:$0xff]
        %v237 = vld [vmem:[%s183 + $0xc1] sm:$0xff]
        %v238 = vld [vmem:[%s183 + $0xd1] sm:$0xff]
        %v239 = vld [vmem:[%s183 + $0xe1] sm:$0xff]
        %v240 = vld [vmem:[%s183 + $0xf1] sm:$0xff]
        %v241 = vld [vmem:[%s183 + $0x101] sm:$0xff]
        %v242 = vld [vmem:[%s183 + $0x111] sm:$0xff]
        %v243 = vpack.c.bf16 %v228, %v227
        %v244 = vpack.c.bf16 %v230, %v229
        %v245 = vpack.c.bf16 %v232, %v231
        %v246 = vpack.c.bf16 %v234, %v233
        %v247 = vpack.c.bf16 %v236, %v235
        %v248 = vpack.c.bf16 %v238, %v237
        %v249 = vpack.c.bf16 %v240, %v239
        %v250 = vpack.c.bf16 %v242, %v241
        %s251 = scalar_lea.vmem %s1, 64
        %v252 = vld [vmem:[%s251] sm:$0xf]
        %v253 = vld [vmem:[%s251 + $0x4] sm:$0xf]
        %v254 = vld [vmem:[%s251 + $0x8] sm:$0xf]
        %v255 = vld [vmem:[%s251 + $0xc] sm:$0xf]
        %v256 = vld [vmem:[%s251 + $0x10] sm:$0xf]
        %v257 = vld [vmem:[%s251 + $0x14] sm:$0xf]
        %v258 = vld [vmem:[%s251 + $0x18] sm:$0xf]
        %v259 = vld [vmem:[%s251 + $0x1c] sm:$0xf]
        %v260 = vld [vmem:[%s251 + $0x20] sm:$0xf]
        %v261 = vld [vmem:[%s251 + $0x24] sm:$0xf]
        %v262 = vld [vmem:[%s251 + $0x28] sm:$0xf]
        %v263 = vld [vmem:[%s251 + $0x2c] sm:$0xf]
        %v264 = vld [vmem:[%s251 + $0x30] sm:$0xf]
        %v265 = vld [vmem:[%s251 + $0x34] sm:$0xf]
        %v266 = vld [vmem:[%s251 + $0x38] sm:$0xf]
        %v267 = vld [vmem:[%s251 + $0x3c] sm:$0xf]
        %v284 = vunpack.c.l.b16 %v252
        %v285 = vunpack.c.l.b16 %v253
        %v286 = vunpack.c.l.b16 %v254
        %v287 = vunpack.c.l.b16 %v255
        %v288 = vunpack.c.l.b16 %v256
        %v289 = vunpack.c.l.b16 %v257
        %v290 = vunpack.c.l.b16 %v258
        %v291 = vunpack.c.l.b16 %v259
        %v292 = vunpack.c.l.b16 %v260
        %v293 = vunpack.c.l.b16 %v261
        %v294 = vunpack.c.l.b16 %v262
        %v295 = vunpack.c.l.b16 %v263
        %v296 = vunpack.c.l.b16 %v264
        %v297 = vunpack.c.l.b16 %v265
        %v298 = vunpack.c.l.b16 %v266
        %v299 = vunpack.c.l.b16 %v267
        %v300 = vpack.c.b16 %v285, %v284
        %v301 = vpack.c.b16 %v287, %v286
        %v302 = vpack.c.b16 %v289, %v288
        %v303 = vpack.c.b16 %v291, %v290
        %v304 = vpack.c.b16 %v293, %v292
        %v305 = vpack.c.b16 %v295, %v294
        %v306 = vpack.c.b16 %v297, %v296
        %v307 = vpack.c.b16 %v299, %v298
        %316 = vmatprep.subr.bf16.mxu0 0
        %317 = vmatpush1.bf16.msra.mxu0 %v300
        %318 = vmatprep.subr.bf16.mxu0 0
        %319 = vmatpush1.bf16.msra.mxu0 %v301
        %320 = vmatprep.subr.bf16.mxu0 0
        %321 = vmatpush1.bf16.msra.mxu0 %v302
        %322 = vmatprep.subr.bf16.mxu0 0
        %323 = vmatpush1.bf16.msra.mxu0 %v303
        %324 = vmatprep.subr.bf16.mxu0 0
        %325 = vmatpush1.bf16.msra.mxu0 %v304
        %326 = vmatprep.subr.bf16.mxu0 0
        %327 = vmatpush1.bf16.msra.mxu0 %v305
        %328 = vmatprep.subr.bf16.mxu0 0
        %329 = vmatpush1.bf16.msra.mxu0 %v306
        %330 = vmatprep.subr.bf16.mxu0 0
        %331 = vmatpush1.bf16.msra.mxu0 %v307
        %332 = vmatprep.subr.bf16.mxu0 0
        %333 = vmatpush1.bf16.msra.mxu0 0
        %334 = vmatprep.subr.bf16.mxu0 0
        %335 = vmatpush1.bf16.msra.mxu0 0
        %336 = vmatprep.subr.bf16.mxu0 0
        %337 = vmatpush1.bf16.msra.mxu0 0
        %338 = vmatprep.subr.bf16.mxu0 0
        %339 = vmatpush1.bf16.msra.mxu0 0
        %340 = vmatprep.subr.bf16.mxu0 0
        %341 = vmatpush1.bf16.msra.mxu0 0
        %342 = vmatprep.subr.bf16.mxu0 0
        %343 = vmatpush1.bf16.msra.mxu0 0
        %344 = vmatprep.subr.bf16.mxu0 0
        %345 = vmatpush1.bf16.msra.mxu0 0
        %346 = vmatprep.subr.bf16.mxu0 0
        %347 = vmatpush1.bf16.msra.mxu0 0
        %348 = vmatprep.mubr.bf16.mxu0 0
        %349 = vmatmul.mubr.bf16.gmra.mrb[0].mxu0 %v243
        %v350 = vpop.f32.mrb[0].mxu0
        %v351 = vadd.f32 0.0, %v350
        %v352 = vpop.f32.mrb[0].mxu0
        %v353 = vpop.f32.mrb[0].mxu0
        %v354 = vadd.f32 0.0, %v353
        %v355 = vpop.f32.mrb[0].mxu0
        %356 = vmatprep.mubr.bf16.mxu0 0
        %357 = vmatmul.mubr.bf16.gmra.mrb[0].mxu0 %v244
        %v358 = vpop.f32.mrb[0].mxu0
        %v359 = vadd.f32 0.0, %v358
        %v360 = vpop.f32.mrb[0].mxu0
        %v361 = vpop.f32.mrb[0].mxu0
        %v362 = vadd.f32 0.0, %v361
        %v363 = vpop.f32.mrb[0].mxu0
        %364 = vmatprep.mubr.bf16.mxu0 0
        %365 = vmatmul.mubr.bf16.gmra.mrb[0].mxu0 %v245
        %v366 = vpop.f32.mrb[0].mxu0
        %v367 = vadd.f32 0.0, %v366
        %v368 = vpop.f32.mrb[0].mxu0
        %v369 = vpop.f32.mrb[0].mxu0
        %v370 = vadd.f32 0.0, %v369
        %v371 = vpop.f32.mrb[0].mxu0
        %372 = vmatprep.mubr.bf16.mxu0 0
        %373 = vmatmul.mubr.bf16.gmra.mrb[0].mxu0 %v246
        %v374 = vpop.f32.mrb[0].mxu0
        %v375 = vadd.f32 0.0, %v374
        %v376 = vpop.f32.mrb[0].mxu0
        %v377 = vpop.f32.mrb[0].mxu0
        %v378 = vadd.f32 0.0, %v377
        %v379 = vpop.f32.mrb[0].mxu0
        %380 = vmatprep.mubr.bf16.mxu0 0
        %381 = vmatmul.mubr.bf16.gmra.mrb[0].mxu0 %v247
        %v382 = vpop.f32.mrb[0].mxu0
        %v383 = vadd.f32 0.0, %v382
        %v384 = vpop.f32.mrb[0].mxu0
        %v385 = vpop.f32.mrb[0].mxu0
        %v386 = vadd.f32 0.0, %v385
        %v387 = vpop.f32.mrb[0].mxu0
        %388 = vmatprep.mubr.bf16.mxu0 0
        %389 = vmatmul.mubr.bf16.gmra.mrb[0].mxu0 %v248
        %v390 = vpop.f32.mrb[0].mxu0
        %v391 = vadd.f32 0.0, %v390
        %v392 = vpop.f32.mrb[0].mxu0
        %v393 = vpop.f32.mrb[0].mxu0
        %v394 = vadd.f32 0.0, %v393
        %v395 = vpop.f32.mrb[0].mxu0
        %396 = vmatprep.mubr.bf16.mxu0 0
        %397 = vmatmul.mubr.bf16.gmra.mrb[0].mxu0 %v249
        %v398 = vpop.f32.mrb[0].mxu0
        %v399 = vadd.f32 0.0, %v398
        %v400 = vpop.f32.mrb[0].mxu0
        %v401 = vpop.f32.mrb[0].mxu0
        %v402 = vadd.f32 0.0, %v401
        %v403 = vpop.f32.mrb[0].mxu0
        %404 = vmatprep.mubr.bf16.mxu0 0
        %405 = vmatmul.mubr.bf16.gmra.mrb[0].mxu0 %v250
        %v406 = vpop.f32.mrb[0].mxu0
        %v407 = vadd.f32 0.0, %v406
        %v408 = vpop.f32.mrb[0].mxu0
        %v409 = vpop.f32.mrb[0].mxu0
        %v410 = vadd.f32 0.0, %v409
        %v411 = vpop.f32.mrb[0].mxu0
        %412 = vdwg.mxu0
        %v429 = vunpack.c.l.b16 %v211
        %v430 = vunpack.c.l.b16 %v212
        %v431 = vunpack.c.l.b16 %v213
        %v432 = vunpack.c.l.b16 %v214
        %v433 = vunpack.c.l.b16 %v215
        %v434 = vunpack.c.l.b16 %v216
        %v435 = vunpack.c.l.b16 %v217
        %v436 = vunpack.c.l.b16 %v218
        %v437 = vunpack.c.l.b16 %v219
        %v438 = vunpack.c.l.b16 %v220
        %v439 = vunpack.c.l.b16 %v221
        %v440 = vunpack.c.l.b16 %v222
        %v441 = vunpack.c.l.b16 %v223
        %v442 = vunpack.c.l.b16 %v224
        %v443 = vunpack.c.l.b16 %v225
        %v444 = vunpack.c.l.b16 %v226
        %v445 = vpack.c.b16 %v430, %v429
        %v446 = vpack.c.b16 %v432, %v431
        %v447 = vpack.c.b16 %v434, %v433
        %v448 = vpack.c.b16 %v436, %v435
        %v449 = vpack.c.b16 %v438, %v437
        %v450 = vpack.c.b16 %v440, %v439
        %v451 = vpack.c.b16 %v442, %v441
        %v452 = vpack.c.b16 %v444, %v443
        %461 = vmatprep.subr.bf16.mxu0 0
        %462 = vmatpush1.bf16.msra.mxu0 %v445
        %463 = vmatprep.subr.bf16.mxu0 0
        %464 = vmatpush1.bf16.msra.mxu0 %v446
        %465 = vmatprep.subr.bf16.mxu0 0
        %466 = vmatpush1.bf16.msra.mxu0 %v447
        %467 = vmatprep.subr.bf16.mxu0 0
        %468 = vmatpush1.bf16.msra.mxu0 %v448
        %469 = vmatprep.subr.bf16.mxu0 0
        %470 = vmatpush1.bf16.msra.mxu0 %v449
        %471 = vmatprep.subr.bf16.mxu0 0
        %472 = vmatpush1.bf16.msra.mxu0 %v450
        %473 = vmatprep.subr.bf16.mxu0 0
        %474 = vmatpush1.bf16.msra.mxu0 %v451
        %475 = vmatprep.subr.bf16.mxu0 0
        %476 = vmatpush1.bf16.msra.mxu0 %v452
        %477 = vmatprep.subr.bf16.mxu0 0
        %478 = vmatpush1.bf16.msra.mxu0 0
        %479 = vmatprep.subr.bf16.mxu0 0
        %480 = vmatpush1.bf16.msra.mxu0 0
        %481 = vmatprep.subr.bf16.mxu0 0
        %482 = vmatpush1.bf16.msra.mxu0 0
        %483 = vmatprep.subr.bf16.mxu0 0
        %484 = vmatpush1.bf16.msra.mxu0 0
        %485 = vmatprep.subr.bf16.mxu0 0
        %486 = vmatpush1.bf16.msra.mxu0 0
        %487 = vmatprep.subr.bf16.mxu0 0
        %488 = vmatpush1.bf16.msra.mxu0 0
        %489 = vmatprep.subr.bf16.mxu0 0
        %490 = vmatpush1.bf16.msra.mxu0 0
        %491 = vmatprep.subr.bf16.mxu0 0
        %492 = vmatpush1.bf16.msra.mxu0 0
        %493 = vmatprep.mubr.bf16.mxu0 0
        %494 = vmatmul.mubr.bf16.gmra.mrb[0].mxu0 %v203
        %v495 = vpop.f32.mrb[0].mxu0
        %v496 = vadd.f32 %v351, %v495
        %v497 = vpop.f32.mrb[0].mxu0
        %v498 = vpop.f32.mrb[0].mxu0
        %v499 = vadd.f32 %v354, %v498
        %v500 = vpop.f32.mrb[0].mxu0
        %501 = vmatprep.mubr.bf16.mxu0 0
        %502 = vmatmul.mubr.bf16.gmra.mrb[0].mxu0 %v204
        %v503 = vpop.f32.mrb[0].mxu0
        %v504 = vadd.f32 %v359, %v503
        %v505 = vpop.f32.mrb[0].mxu0
        %v506 = vpop.f32.mrb[0].mxu0
        %v507 = vadd.f32 %v362, %v506
        %v508 = vpop.f32.mrb[0].mxu0
        %509 = vmatprep.mubr.bf16.mxu0 0
        %510 = vmatmul.mubr.bf16.gmra.mrb[0].mxu0 %v205
        %v511 = vpop.f32.mrb[0].mxu0
        %v512 = vadd.f32 %v367, %v511
        %v513 = vpop.f32.mrb[0].mxu0
        %v514 = vpop.f32.mrb[0].mxu0
        %v515 = vadd.f32 %v370, %v514
        %v516 = vpop.f32.mrb[0].mxu0
        %517 = vmatprep.mubr.bf16.mxu0 0
        %518 = vmatmul.mubr.bf16.gmra.mrb[0].mxu0 %v206
        %v519 = vpop.f32.mrb[0].mxu0
        %v520 = vadd.f32 %v375, %v519
        %v521 = vpop.f32.mrb[0].mxu0
        %v522 = vpop.f32.mrb[0].mxu0
        %v523 = vadd.f32 %v378, %v522
        %v524 = vpop.f32.mrb[0].mxu0
        %525 = vmatprep.mubr.bf16.mxu0 0
        %526 = vmatmul.mubr.bf16.gmra.mrb[0].mxu0 %v207
        %v527 = vpop.f32.mrb[0].mxu0
        %v528 = vadd.f32 %v383, %v527
        %v529 = vpop.f32.mrb[0].mxu0
        %v530 = vpop.f32.mrb[0].mxu0
        %v531 = vadd.f32 %v386, %v530
        %v532 = vpop.f32.mrb[0].mxu0
        %533 = vmatprep.mubr.bf16.mxu0 0
        %534 = vmatmul.mubr.bf16.gmra.mrb[0].mxu0 %v208
        %v535 = vpop.f32.mrb[0].mxu0
        %v536 = vadd.f32 %v391, %v535
        %v537 = vpop.f32.mrb[0].mxu0
        %v538 = vpop.f32.mrb[0].mxu0
        %v539 = vadd.f32 %v394, %v538
        %v540 = vpop.f32.mrb[0].mxu0
        %541 = vmatprep.mubr.bf16.mxu0 0
        %542 = vmatmul.mubr.bf16.gmra.mrb[0].mxu0 %v209
        %v543 = vpop.f32.mrb[0].mxu0
        %v544 = vadd.f32 %v399, %v543
        %v545 = vpop.f32.mrb[0].mxu0
        %v546 = vpop.f32.mrb[0].mxu0
        %v547 = vadd.f32 %v402, %v546
        %v548 = vpop.f32.mrb[0].mxu0
        %549 = vmatprep.mubr.bf16.mxu0 0
        %550 = vmatmul.mubr.bf16.gmra.mrb[0].mxu0 %v210
        %v551 = vpop.f32.mrb[0].mxu0
        %v552 = vadd.f32 %v407, %v551
        %v553 = vpop.f32.mrb[0].mxu0
        %v554 = vpop.f32.mrb[0].mxu0
        %v555 = vadd.f32 %v410, %v554
        %v556 = vpop.f32.mrb[0].mxu0
        %557 = vdwg.mxu0
        %v558 = vld [vmem:[%s183 + $0x2] sm:$0xff]
        %v559 = vld [vmem:[%s183 + $0x12] sm:$0xff]
        %v560 = vld [vmem:[%s183 + $0x22] sm:$0xff]
        %v561 = vld [vmem:[%s183 + $0x32] sm:$0xff]
        %v562 = vld [vmem:[%s183 + $0x42] sm:$0xff]
        %v563 = vld [vmem:[%s183 + $0x52] sm:$0xff]
        %v564 = vld [vmem:[%s183 + $0x62] sm:$0xff]
        %v565 = vld [vmem:[%s183 + $0x72] sm:$0xff]
        %v566 = vld [vmem:[%s183 + $0xa2] sm:$0xff]
        %v567 = vld [vmem:[%s183 + $0xb2] sm:$0xff]
        %v568 = vld [vmem:[%s183 + $0xc2] sm:$0xff]
        %v569 = vld [vmem:[%s183 + $0xd2] sm:$0xff]
        %v570 = vld [vmem:[%s183 + $0xe2] sm:$0xff]
        %v571 = vld [vmem:[%s183 + $0xf2] sm:$0xff]
        %v572 = vld [vmem:[%s183 + $0x102] sm:$0xff]
        %v573 = vld [vmem:[%s183 + $0x112] sm:$0xff]
        %v574 = vpack.c.bf16 %v559, %v558
        %v575 = vpack.c.bf16 %v561, %v560
        %v576 = vpack.c.bf16 %v563, %v562
        %v577 = vpack.c.bf16 %v565, %v564
        %v578 = vpack.c.bf16 %v567, %v566
        %v579 = vpack.c.bf16 %v569, %v568
        %v580 = vpack.c.bf16 %v571, %v570
        %v581 = vpack.c.bf16 %v573, %v572
        %s582 = scalar_lea.vmem %s1, 128
        %v583 = vld [vmem:[%s582] sm:$0xf]
        %v584 = vld [vmem:[%s582 + $0x4] sm:$0xf]
        %v585 = vld [vmem:[%s582 + $0x8] sm:$0xf]
        %v586 = vld [vmem:[%s582 + $0xc] sm:$0xf]
        %v587 = vld [vmem:[%s582 + $0x10] sm:$0xf]
        %v588 = vld [vmem:[%s582 + $0x14] sm:$0xf]
        %v589 = vld [vmem:[%s582 + $0x18] sm:$0xf]
        %v590 = vld [vmem:[%s582 + $0x1c] sm:$0xf]
        %v591 = vld [vmem:[%s582 + $0x20] sm:$0xf]
        %v592 = vld [vmem:[%s582 + $0x24] sm:$0xf]
        %v593 = vld [vmem:[%s582 + $0x28] sm:$0xf]
        %v594 = vld [vmem:[%s582 + $0x2c] sm:$0xf]
        %v595 = vld [vmem:[%s582 + $0x30] sm:$0xf]
        %v596 = vld [vmem:[%s582 + $0x34] sm:$0xf]
        %v597 = vld [vmem:[%s582 + $0x38] sm:$0xf]
        %v598 = vld [vmem:[%s582 + $0x3c] sm:$0xf]
        %v615 = vunpack.c.l.b16 %v583
        %v616 = vunpack.c.l.b16 %v584
        %v617 = vunpack.c.l.b16 %v585
        %v618 = vunpack.c.l.b16 %v586
        %v619 = vunpack.c.l.b16 %v587
        %v620 = vunpack.c.l.b16 %v588
        %v621 = vunpack.c.l.b16 %v589
        %v622 = vunpack.c.l.b16 %v590
        %v623 = vunpack.c.l.b16 %v591
        %v624 = vunpack.c.l.b16 %v592
        %v625 = vunpack.c.l.b16 %v593
        %v626 = vunpack.c.l.b16 %v594
        %v627 = vunpack.c.l.b16 %v595
        %v628 = vunpack.c.l.b16 %v596
        %v629 = vunpack.c.l.b16 %v597
        %v630 = vunpack.c.l.b16 %v598
        %v631 = vpack.c.b16 %v616, %v615
        %v632 = vpack.c.b16 %v618, %v617
        %v633 = vpack.c.b16 %v620, %v619
        %v634 = vpack.c.b16 %v622, %v621
        %v635 = vpack.c.b16 %v624, %v623
        %v636 = vpack.c.b16 %v626, %v625
        %v637 = vpack.c.b16 %v628, %v627
        %v638 = vpack.c.b16 %v630, %v629
        %647 = vmatprep.subr.bf16.mxu0 0
        %648 = vmatpush1.bf16.msra.mxu0 %v631
        %649 = vmatprep.subr.bf16.mxu0 0
        %650 = vmatpush1.bf16.msra.mxu0 %v632
        %651 = vmatprep.subr.bf16.mxu0 0
        %652 = vmatpush1.bf16.msra.mxu0 %v633
        %653 = vmatprep.subr.bf16.mxu0 0
        %654 = vmatpush1.bf16.msra.mxu0 %v634
        %655 = vmatprep.subr.bf16.mxu0 0
        %656 = vmatpush1.bf16.msra.mxu0 %v635
        %657 = vmatprep.subr.bf16.mxu0 0
        %658 = vmatpush1.bf16.msra.mxu0 %v636
        %659 = vmatprep.subr.bf16.mxu0 0
        %660 = vmatpush1.bf16.msra.mxu0 %v637
        %661 = vmatprep.subr.bf16.mxu0 0
        %662 = vmatpush1.bf16.msra.mxu0 %v638
        %663 = vmatprep.subr.bf16.mxu0 0
        %664 = vmatpush1.bf16.msra.mxu0 0
        %665 = vmatprep.subr.bf16.mxu0 0
        %666 = vmatpush1.bf16.msra.mxu0 0
        %667 = vmatprep.subr.bf16.mxu0 0
        %668 = vmatpush1.bf16.msra.mxu0 0
        %669 = vmatprep.subr.bf16.mxu0 0
        %670 = vmatpush1.bf16.msra.mxu0 0
        %671 = vmatprep.subr.bf16.mxu0 0
        %672 = vmatpush1.bf16.msra.mxu0 0
        %673 = vmatprep.subr.bf16.mxu0 0
        %674 = vmatpush1.bf16.msra.mxu0 0
        %675 = vmatprep.subr.bf16.mxu0 0
        %676 = vmatpush1.bf16.msra.mxu0 0
        %677 = vmatprep.subr.bf16.mxu0 0
        %678 = vmatpush1.bf16.msra.mxu0 0
        %679 = vmatprep.mubr.bf16.mxu0 0
        %680 = vmatmul.mubr.bf16.gmra.mrb[0].mxu0 %v574
        %v681 = vpop.f32.mrb[0].mxu0
        %v682 = vadd.f32 0.0, %v681
        %v683 = vpop.f32.mrb[0].mxu0
        %v684 = vpop.f32.mrb[0].mxu0
        %v685 = vadd.f32 0.0, %v684
        %v686 = vpop.f32.mrb[0].mxu0
        %687 = vmatprep.mubr.bf16.mxu0 0
        %688 = vmatmul.mubr.bf16.gmra.mrb[0].mxu0 %v575
        %v689 = vpop.f32.mrb[0].mxu0
        %v690 = vadd.f32 0.0, %v689
        %v691 = vpop.f32.mrb[0].mxu0
        %v692 = vpop.f32.mrb[0].mxu0
        %v693 = vadd.f32 0.0, %v692
        %v694 = vpop.f32.mrb[0].mxu0
        %695 = vmatprep.mubr.bf16.mxu0 0
        %696 = vmatmul.mubr.bf16.gmra.mrb[0].mxu0 %v576
        %v697 = vpop.f32.mrb[0].mxu0
        %v698 = vadd.f32 0.0, %v697
        %v699 = vpop.f32.mrb[0].mxu0
        %v700 = vpop.f32.mrb[0].mxu0
        %v701 = vadd.f32 0.0, %v700
        %v702 = vpop.f32.mrb[0].mxu0
        %703 = vmatprep.mubr.bf16.mxu0 0
        %704 = vmatmul.mubr.bf16.gmra.mrb[0].mxu0 %v577
        %v705 = vpop.f32.mrb[0].mxu0
        %v706 = vadd.f32 0.0, %v705
        %v707 = vpop.f32.mrb[0].mxu0
        %v708 = vpop.f32.mrb[0].mxu0
        %v709 = vadd.f32 0.0, %v708
        %v710 = vpop.f32.mrb[0].mxu0
        %711 = vmatprep.mubr.bf16.mxu0 0
        %712 = vmatmul.mubr.bf16.gmra.mrb[0].mxu0 %v578
        %v713 = vpop.f32.mrb[0].mxu0
        %v714 = vadd.f32 0.0, %v713
        %v715 = vpop.f32.mrb[0].mxu0
        %v716 = vpop.f32.mrb[0].mxu0
        %v717 = vadd.f32 0.0, %v716
        %v718 = vpop.f32.mrb[0].mxu0
        %719 = vmatprep.mubr.bf16.mxu0 0
        %720 = vmatmul.mubr.bf16.gmra.mrb[0].mxu0 %v579
        %v721 = vpop.f32.mrb[0].mxu0
        %v722 = vadd.f32 0.0, %v721
        %v723 = vpop.f32.mrb[0].mxu0
        %v724 = vpop.f32.mrb[0].mxu0
        %v725 = vadd.f32 0.0, %v724
        %v726 = vpop.f32.mrb[0].mxu0
        %727 = vmatprep.mubr.bf16.mxu0 0
        %728 = vmatmul.mubr.bf16.gmra.mrb[0].mxu0 %v580
        %v729 = vpop.f32.mrb[0].mxu0
        %v730 = vadd.f32 0.0, %v729
        %v731 = vpop.f32.mrb[0].mxu0
        %v732 = vpop.f32.mrb[0].mxu0
        %v733 = vadd.f32 0.0, %v732
        %v734 = vpop.f32.mrb[0].mxu0
        %735 = vmatprep.mubr.bf16.mxu0 0
        %736 = vmatmul.mubr.bf16.gmra.mrb[0].mxu0 %v581
        %v737 = vpop.f32.mrb[0].mxu0
        %v738 = vadd.f32 0.0, %v737
        %v739 = vpop.f32.mrb[0].mxu0
        %v740 = vpop.f32.mrb[0].mxu0
        %v741 = vadd.f32 0.0, %v740
        %v742 = vpop.f32.mrb[0].mxu0
        %743 = vdwg.mxu0
        %v744 = vadd.f32 %v496, %v682
        %v745 = vadd.f32 %v499, %v685
        %v746 = vadd.f32 %v504, %v690
        %v747 = vadd.f32 %v507, %v693
        %v748 = vadd.f32 %v512, %v698
        %v749 = vadd.f32 %v515, %v701
        %v750 = vadd.f32 %v520, %v706
        %v751 = vadd.f32 %v523, %v709
        %v752 = vadd.f32 %v528, %v714
        %v753 = vadd.f32 %v531, %v717
        %v754 = vadd.f32 %v536, %v722
        %v755 = vadd.f32 %v539, %v725
        %v756 = vadd.f32 %v544, %v730
        %v757 = vadd.f32 %v547, %v733
        %v758 = vadd.f32 %v552, %v738
        %v759 = vadd.f32 %v555, %v741
        %s760 = scalar_lea.vmem %s183, 16
        %v761 = vld [vmem:[%s760] sm:$0xff]
        %v762 = vld [vmem:[%s760 + $0x10] sm:$0xff]
        %v763 = vld [vmem:[%s760 + $0x20] sm:$0xff]
        %v764 = vld [vmem:[%s760 + $0x30] sm:$0xff]
        %v765 = vld [vmem:[%s760 + $0x40] sm:$0xff]
        %v766 = vld [vmem:[%s760 + $0x50] sm:$0xff]
        %v767 = vld [vmem:[%s760 + $0x60] sm:$0xff]
        %v768 = vld [vmem:[%s760 + $0x70] sm:$0xff]
        %v769 = vld [vmem:[%s760 + $0xa0] sm:$0xff]
        %v770 = vld [vmem:[%s760 + $0xb0] sm:$0xff]
        %v771 = vld [vmem:[%s760 + $0xc0] sm:$0xff]
        %v772 = vld [vmem:[%s760 + $0xd0] sm:$0xff]
        %v773 = vld [vmem:[%s760 + $0xe0] sm:$0xff]
        %v774 = vld [vmem:[%s760 + $0xf0] sm:$0xff]
        %v775 = vld [vmem:[%s760 + $0x100] sm:$0xff]
        %v776 = vld [vmem:[%s760 + $0x110] sm:$0xff]
        %v777 = vpack.c.bf16 %v762, %v761
        %v778 = vpack.c.bf16 %v764, %v763
        %v779 = vpack.c.bf16 %v766, %v765
        %v780 = vpack.c.bf16 %v768, %v767
        %v781 = vpack.c.bf16 %v770, %v769
        %v782 = vpack.c.bf16 %v772, %v771
        %v783 = vpack.c.bf16 %v774, %v773
        %v784 = vpack.c.bf16 %v776, %v775
        %s785 = scalar_lea.vmem %s1, 192
        %v786 = vld [vmem:[%s785] sm:$0xf]
        %v787 = vld [vmem:[%s785 + $0x4] sm:$0xf]
        %v788 = vld [vmem:[%s785 + $0x8] sm:$0xf]
        %v789 = vld [vmem:[%s785 + $0xc] sm:$0xf]
        %v790 = vld [vmem:[%s785 + $0x10] sm:$0xf]
        %v791 = vld [vmem:[%s785 + $0x14] sm:$0xf]
        %v792 = vld [vmem:[%s785 + $0x18] sm:$0xf]
        %v793 = vld [vmem:[%s785 + $0x1c] sm:$0xf]
        %v794 = vld [vmem:[%s785 + $0x20] sm:$0xf]
        %v795 = vld [vmem:[%s785 + $0x24] sm:$0xf]
        %v796 = vld [vmem:[%s785 + $0x28] sm:$0xf]
        %v797 = vld [vmem:[%s785 + $0x2c] sm:$0xf]
        %v798 = vld [vmem:[%s785 + $0x30] sm:$0xf]
        %v799 = vld [vmem:[%s785 + $0x34] sm:$0xf]
        %v800 = vld [vmem:[%s785 + $0x38] sm:$0xf]
        %v801 = vld [vmem:[%s785 + $0x3c] sm:$0xf]
        %v818 = vunpack.c.l.b16 %v786
        %v819 = vunpack.c.l.b16 %v787
        %v820 = vunpack.c.l.b16 %v788
        %v821 = vunpack.c.l.b16 %v789
        %v822 = vunpack.c.l.b16 %v790
        %v823 = vunpack.c.l.b16 %v791
        %v824 = vunpack.c.l.b16 %v792
        %v825 = vunpack.c.l.b16 %v793
        %v826 = vunpack.c.l.b16 %v794
        %v827 = vunpack.c.l.b16 %v795
        %v828 = vunpack.c.l.b16 %v796
        %v829 = vunpack.c.l.b16 %v797
        %v830 = vunpack.c.l.b16 %v798
        %v831 = vunpack.c.l.b16 %v799
        %v832 = vunpack.c.l.b16 %v800
        %v833 = vunpack.c.l.b16 %v801
        %v834 = vpack.c.b16 %v819, %v818
        %v835 = vpack.c.b16 %v821, %v820
        %v836 = vpack.c.b16 %v823, %v822
        %v837 = vpack.c.b16 %v825, %v824
        %v838 = vpack.c.b16 %v827, %v826
        %v839 = vpack.c.b16 %v829, %v828
        %v840 = vpack.c.b16 %v831, %v830
        %v841 = vpack.c.b16 %v833, %v832
        %850 = vmatprep.subr.bf16.mxu0 0
        %851 = vmatpush1.bf16.msra.mxu0 %v834
        %852 = vmatprep.subr.bf16.mxu0 0
        %853 = vmatpush1.bf16.msra.mxu0 %v835
        %854 = vmatprep.subr.bf16.mxu0 0
        %855 = vmatpush1.bf16.msra.mxu0 %v836
        %856 = vmatprep.subr.bf16.mxu0 0
        %857 = vmatpush1.bf16.msra.mxu0 %v837
        %858 = vmatprep.subr.bf16.mxu0 0
        %859 = vmatpush1.bf16.msra.mxu0 %v838
        %860 = vmatprep.subr.bf16.mxu0 0
        %861 = vmatpush1.bf16.msra.mxu0 %v839
        %862 = vmatprep.subr.bf16.mxu0 0
        %863 = vmatpush1.bf16.msra.mxu0 %v840
        %864 = vmatprep.subr.bf16.mxu0 0
        %865 = vmatpush1.bf16.msra.mxu0 %v841
        %866 = vmatprep.subr.bf16.mxu0 0
        %867 = vmatpush1.bf16.msra.mxu0 0
        %868 = vmatprep.subr.bf16.mxu0 0
        %869 = vmatpush1.bf16.msra.mxu0 0
        %870 = vmatprep.subr.bf16.mxu0 0
        %871 = vmatpush1.bf16.msra.mxu0 0
        %872 = vmatprep.subr.bf16.mxu0 0
        %873 = vmatpush1.bf16.msra.mxu0 0
        %874 = vmatprep.subr.bf16.mxu0 0
        %875 = vmatpush1.bf16.msra.mxu0 0
        %876 = vmatprep.subr.bf16.mxu0 0
        %877 = vmatpush1.bf16.msra.mxu0 0
        %878 = vmatprep.subr.bf16.mxu0 0
        %879 = vmatpush1.bf16.msra.mxu0 0
        %880 = vmatprep.subr.bf16.mxu0 0
        %881 = vmatpush1.bf16.msra.mxu0 0
        %882 = vmatprep.mubr.bf16.mxu0 0
        %883 = vmatmul.mubr.bf16.gmra.mrb[0].mxu0 %v777
        %v884 = vpop.f32.mrb[0].mxu0
        %v885 = vadd.f32 0.0, %v884
        %v886 = vpop.f32.mrb[0].mxu0
        %v887 = vpop.f32.mrb[0].mxu0
        %v888 = vadd.f32 0.0, %v887
        %v889 = vpop.f32.mrb[0].mxu0
        %890 = vmatprep.mubr.bf16.mxu0 0
        %891 = vmatmul.mubr.bf16.gmra.mrb[0].mxu0 %v778
        %v892 = vpop.f32.mrb[0].mxu0
        %v893 = vadd.f32 0.0, %v892
        %v894 = vpop.f32.mrb[0].mxu0
        %v895 = vpop.f32.mrb[0].mxu0
        %v896 = vadd.f32 0.0, %v895
        %v897 = vpop.f32.mrb[0].mxu0
        %898 = vmatprep.mubr.bf16.mxu0 0
        %899 = vmatmul.mubr.bf16.gmra.mrb[0].mxu0 %v779
        %v900 = vpop.f32.mrb[0].mxu0
        %v901 = vadd.f32 0.0, %v900
        %v902 = vpop.f32.mrb[0].mxu0
        %v903 = vpop.f32.mrb[0].mxu0
        %v904 = vadd.f32 0.0, %v903
        %v905 = vpop.f32.mrb[0].mxu0
        %906 = vmatprep.mubr.bf16.mxu0 0
        %907 = vmatmul.mubr.bf16.gmra.mrb[0].mxu0 %v780
        %v908 = vpop.f32.mrb[0].mxu0
        %v909 = vadd.f32 0.0, %v908
        %v910 = vpop.f32.mrb[0].mxu0
        %v911 = vpop.f32.mrb[0].mxu0
        %v912 = vadd.f32 0.0, %v911
        %v913 = vpop.f32.mrb[0].mxu0
        %914 = vmatprep.mubr.bf16.mxu0 0
        %915 = vmatmul.mubr.bf16.gmra.mrb[0].mxu0 %v781
        %v916 = vpop.f32.mrb[0].mxu0
        %v917 = vadd.f32 0.0, %v916
        %v918 = vpop.f32.mrb[0].mxu0
        %v919 = vpop.f32.mrb[0].mxu0
        %v920 = vadd.f32 0.0, %v919
        %v921 = vpop.f32.mrb[0].mxu0
        %922 = vmatprep.mubr.bf16.mxu0 0
        %923 = vmatmul.mubr.bf16.gmra.mrb[0].mxu0 %v782
        %v924 = vpop.f32.mrb[0].mxu0
        %v925 = vadd.f32 0.0, %v924
        %v926 = vpop.f32.mrb[0].mxu0
        %v927 = vpop.f32.mrb[0].mxu0
        %v928 = vadd.f32 0.0, %v927
        %v929 = vpop.f32.mrb[0].mxu0
        %930 = vmatprep.mubr.bf16.mxu0 0
        %931 = vmatmul.mubr.bf16.gmra.mrb[0].mxu0 %v783
        %v932 = vpop.f32.mrb[0].mxu0
        %v933 = vadd.f32 0.0, %v932
        %v934 = vpop.f32.mrb[0].mxu0
        %v935 = vpop.f32.mrb[0].mxu0
        %v936 = vadd.f32 0.0, %v935
        %v937 = vpop.f32.mrb[0].mxu0
        %938 = vmatprep.mubr.bf16.mxu0 0
        %939 = vmatmul.mubr.bf16.gmra.mrb[0].mxu0 %v784
        %v940 = vpop.f32.mrb[0].mxu0
        %v941 = vadd.f32 0.0, %v940
        %v942 = vpop.f32.mrb[0].mxu0
        %v943 = vpop.f32.mrb[0].mxu0
        %v944 = vadd.f32 0.0, %v943
        %v945 = vpop.f32.mrb[0].mxu0
        %946 = vdwg.mxu0
        %v947 = vadd.f32 %v744, %v885
        %v948 = vadd.f32 %v745, %v888
        %v949 = vadd.f32 %v746, %v893
        %v950 = vadd.f32 %v747, %v896
        %v951 = vadd.f32 %v748, %v901
        %v952 = vadd.f32 %v749, %v904
        %v953 = vadd.f32 %v750, %v909
        %v954 = vadd.f32 %v751, %v912
        %v955 = vadd.f32 %v752, %v917
        %v956 = vadd.f32 %v753, %v920
        %v957 = vadd.f32 %v754, %v925
        %v958 = vadd.f32 %v755, %v928
        %v959 = vadd.f32 %v756, %v933
        %v960 = vadd.f32 %v757, %v936
        %v961 = vadd.f32 %v758, %v941
        %v962 = vadd.f32 %v759, %v944
        %v963 = vld [vmem:[%s760 + $0x1] sm:$0xff]
        %v964 = vld [vmem:[%s760 + $0x11] sm:$0xff]
        %v965 = vld [vmem:[%s760 + $0x21] sm:$0xff]
        %v966 = vld [vmem:[%s760 + $0x31] sm:$0xff]
        %v967 = vld [vmem:[%s760 + $0x41] sm:$0xff]
        %v968 = vld [vmem:[%s760 + $0x51] sm:$0xff]
        %v969 = vld [vmem:[%s760 + $0x61] sm:$0xff]
        %v970 = vld [vmem:[%s760 + $0x71] sm:$0xff]
        %v971 = vld [vmem:[%s760 + $0xa1] sm:$0xff]
        %v972 = vld [vmem:[%s760 + $0xb1] sm:$0xff]
        %v973 = vld [vmem:[%s760 + $0xc1] sm:$0xff]
        %v974 = vld [vmem:[%s760 + $0xd1] sm:$0xff]
        %v975 = vld [vmem:[%s760 + $0xe1] sm:$0xff]
        %v976 = vld [vmem:[%s760 + $0xf1] sm:$0xff]
        %v977 = vld [vmem:[%s760 + $0x101] sm:$0xff]
        %v978 = vld [vmem:[%s760 + $0x111] sm:$0xff]
        %v979 = vpack.c.bf16 %v964, %v963
        %v980 = vpack.c.bf16 %v966, %v965
        %v981 = vpack.c.bf16 %v968, %v967
        %v982 = vpack.c.bf16 %v970, %v969
        %v983 = vpack.c.bf16 %v972, %v971
        %v984 = vpack.c.bf16 %v974, %v973
        %v985 = vpack.c.bf16 %v976, %v975
        %v986 = vpack.c.bf16 %v978, %v977
        %s987 = scalar_lea.vmem %s1, 256
        %v988 = vld [vmem:[%s987] sm:$0xf]
        %v989 = vld [vmem:[%s987 + $0x4] sm:$0xf]
        %v990 = vld [vmem:[%s987 + $0x8] sm:$0xf]
        %v991 = vld [vmem:[%s987 + $0xc] sm:$0xf]
        %v992 = vld [vmem:[%s987 + $0x10] sm:$0xf]
        %v993 = vld [vmem:[%s987 + $0x14] sm:$0xf]
        %v994 = vld [vmem:[%s987 + $0x18] sm:$0xf]
        %v995 = vld [vmem:[%s987 + $0x1c] sm:$0xf]
        %v996 = vld [vmem:[%s987 + $0x20] sm:$0xf]
        %v997 = vld [vmem:[%s987 + $0x24] sm:$0xf]
        %v998 = vld [vmem:[%s987 + $0x28] sm:$0xf]
        %v999 = vld [vmem:[%s987 + $0x2c] sm:$0xf]
        %v1000 = vld [vmem:[%s987 + $0x30] sm:$0xf]
        %v1001 = vld [vmem:[%s987 + $0x34] sm:$0xf]
        %v1002 = vld [vmem:[%s987 + $0x38] sm:$0xf]
        %v1003 = vld [vmem:[%s987 + $0x3c] sm:$0xf]
        %v1020 = vunpack.c.l.b16 %v988
        %v1021 = vunpack.c.l.b16 %v989
        %v1022 = vunpack.c.l.b16 %v990
        %v1023 = vunpack.c.l.b16 %v991
        %v1024 = vunpack.c.l.b16 %v992
        %v1025 = vunpack.c.l.b16 %v993
        %v1026 = vunpack.c.l.b16 %v994
        %v1027 = vunpack.c.l.b16 %v995
        %v1028 = vunpack.c.l.b16 %v996
        %v1029 = vunpack.c.l.b16 %v997
        %v1030 = vunpack.c.l.b16 %v998
        %v1031 = vunpack.c.l.b16 %v999
        %v1032 = vunpack.c.l.b16 %v1000
        %v1033 = vunpack.c.l.b16 %v1001
        %v1034 = vunpack.c.l.b16 %v1002
        %v1035 = vunpack.c.l.b16 %v1003
        %v1036 = vpack.c.b16 %v1021, %v1020
        %v1037 = vpack.c.b16 %v1023, %v1022
        %v1038 = vpack.c.b16 %v1025, %v1024
        %v1039 = vpack.c.b16 %v1027, %v1026
        %v1040 = vpack.c.b16 %v1029, %v1028
        %v1041 = vpack.c.b16 %v1031, %v1030
        %v1042 = vpack.c.b16 %v1033, %v1032
        %v1043 = vpack.c.b16 %v1035, %v1034
        %1052 = vmatprep.subr.bf16.mxu0 0
        %1053 = vmatpush1.bf16.msra.mxu0 %v1036
        %1054 = vmatprep.subr.bf16.mxu0 0
        %1055 = vmatpush1.bf16.msra.mxu0 %v1037
        %1056 = vmatprep.subr.bf16.mxu0 0
        %1057 = vmatpush1.bf16.msra.mxu0 %v1038
        %1058 = vmatprep.subr.bf16.mxu0 0
        %1059 = vmatpush1.bf16.msra.mxu0 %v1039
        %1060 = vmatprep.subr.bf16.mxu0 0
        %1061 = vmatpush1.bf16.msra.mxu0 %v1040
        %1062 = vmatprep.subr.bf16.mxu0 0
        %1063 = vmatpush1.bf16.msra.mxu0 %v1041
        %1064 = vmatprep.subr.bf16.mxu0 0
        %1065 = vmatpush1.bf16.msra.mxu0 %v1042
        %1066 = vmatprep.subr.bf16.mxu0 0
        %1067 = vmatpush1.bf16.msra.mxu0 %v1043
        %1068 = vmatprep.subr.bf16.mxu0 0
        %1069 = vmatpush1.bf16.msra.mxu0 0
        %1070 = vmatprep.subr.bf16.mxu0 0
        %1071 = vmatpush1.bf16.msra.mxu0 0
        %1072 = vmatprep.subr.bf16.mxu0 0
        %1073 = vmatpush1.bf16.msra.mxu0 0
        %1074 = vmatprep.subr.bf16.mxu0 0
        %1075 = vmatpush1.bf16.msra.mxu0 0
        %1076 = vmatprep.subr.bf16.mxu0 0
        %1077 = vmatpush1.bf16.msra.mxu0 0
        %1078 = vmatprep.subr.bf16.mxu0 0
        %1079 = vmatpush1.bf16.msra.mxu0 0
        %1080 = vmatprep.subr.bf16.mxu0 0
        %1081 = vmatpush1.bf16.msra.mxu0 0
        %1082 = vmatprep.subr.bf16.mxu0 0
        %1083 = vmatpush1.bf16.msra.mxu0 0
        %1084 = vmatprep.mubr.bf16.mxu0 0
        %1085 = vmatmul.mubr.bf16.gmra.mrb[0].mxu0 %v979
        %v1086 = vpop.f32.mrb[0].mxu0
        %v1087 = vadd.f32 0.0, %v1086
        %v1088 = vpop.f32.mrb[0].mxu0
        %v1089 = vpop.f32.mrb[0].mxu0
        %v1090 = vadd.f32 0.0, %v1089
        %v1091 = vpop.f32.mrb[0].mxu0
        %1092 = vmatprep.mubr.bf16.mxu0 0
        %1093 = vmatmul.mubr.bf16.gmra.mrb[0].mxu0 %v980
        %v1094 = vpop.f32.mrb[0].mxu0
        %v1095 = vadd.f32 0.0, %v1094
        %v1096 = vpop.f32.mrb[0].mxu0
        %v1097 = vpop.f32.mrb[0].mxu0
        %v1098 = vadd.f32 0.0, %v1097
        %v1099 = vpop.f32.mrb[0].mxu0
        %1100 = vmatprep.mubr.bf16.mxu0 0
        %1101 = vmatmul.mubr.bf16.gmra.mrb[0].mxu0 %v981
        %v1102 = vpop.f32.mrb[0].mxu0
        %v1103 = vadd.f32 0.0, %v1102
        %v1104 = vpop.f32.mrb[0].mxu0
        %v1105 = vpop.f32.mrb[0].mxu0
        %v1106 = vadd.f32 0.0, %v1105
        %v1107 = vpop.f32.mrb[0].mxu0
        %1108 = vmatprep.mubr.bf16.mxu0 0
        %1109 = vmatmul.mubr.bf16.gmra.mrb[0].mxu0 %v982
        %v1110 = vpop.f32.mrb[0].mxu0
        %v1111 = vadd.f32 0.0, %v1110
        %v1112 = vpop.f32.mrb[0].mxu0
        %v1113 = vpop.f32.mrb[0].mxu0
        %v1114 = vadd.f32 0.0, %v1113
        %v1115 = vpop.f32.mrb[0].mxu0
        %1116 = vmatprep.mubr.bf16.mxu0 0
        %1117 = vmatmul.mubr.bf16.gmra.mrb[0].mxu0 %v983
        %v1118 = vpop.f32.mrb[0].mxu0
        %v1119 = vadd.f32 0.0, %v1118
        %v1120 = vpop.f32.mrb[0].mxu0
        %v1121 = vpop.f32.mrb[0].mxu0
        %v1122 = vadd.f32 0.0, %v1121
        %v1123 = vpop.f32.mrb[0].mxu0
        %1124 = vmatprep.mubr.bf16.mxu0 0
        %1125 = vmatmul.mubr.bf16.gmra.mrb[0].mxu0 %v984
        %v1126 = vpop.f32.mrb[0].mxu0
        %v1127 = vadd.f32 0.0, %v1126
        %v1128 = vpop.f32.mrb[0].mxu0
        %v1129 = vpop.f32.mrb[0].mxu0
        %v1130 = vadd.f32 0.0, %v1129
        %v1131 = vpop.f32.mrb[0].mxu0
        %1132 = vmatprep.mubr.bf16.mxu0 0
        %1133 = vmatmul.mubr.bf16.gmra.mrb[0].mxu0 %v985
        %v1134 = vpop.f32.mrb[0].mxu0
        %v1135 = vadd.f32 0.0, %v1134
        %v1136 = vpop.f32.mrb[0].mxu0
        %v1137 = vpop.f32.mrb[0].mxu0
        %v1138 = vadd.f32 0.0, %v1137
        %v1139 = vpop.f32.mrb[0].mxu0
        %1140 = vmatprep.mubr.bf16.mxu0 0
        %1141 = vmatmul.mubr.bf16.gmra.mrb[0].mxu0 %v986
        %v1142 = vpop.f32.mrb[0].mxu0
        %v1143 = vadd.f32 0.0, %v1142
        %v1144 = vpop.f32.mrb[0].mxu0
        %v1145 = vpop.f32.mrb[0].mxu0
        %v1146 = vadd.f32 0.0, %v1145
        %v1147 = vpop.f32.mrb[0].mxu0
        %1148 = vdwg.mxu0
        %v1149 = vadd.f32 %v947, %v1087
        %v1150 = vadd.f32 %v948, %v1090
        %v1151 = vadd.f32 %v949, %v1095
        %v1152 = vadd.f32 %v950, %v1098
        %v1153 = vadd.f32 %v951, %v1103
        %v1154 = vadd.f32 %v952, %v1106
        %v1155 = vadd.f32 %v953, %v1111
        %v1156 = vadd.f32 %v954, %v1114
        %v1157 = vadd.f32 %v955, %v1119
        %v1158 = vadd.f32 %v956, %v1122
        %v1159 = vadd.f32 %v957, %v1127
        %v1160 = vadd.f32 %v958, %v1130
        %v1161 = vadd.f32 %v959, %v1135
        %v1162 = vadd.f32 %v960, %v1138
        %v1163 = vadd.f32 %v961, %v1143
        %v1164 = vadd.f32 %v962, %v1146
        %v1165 = vld [vmem:[%s760 + $0x2] sm:$0xff]
        %v1166 = vld [vmem:[%s760 + $0x12] sm:$0xff]
        %v1167 = vld [vmem:[%s760 + $0x22] sm:$0xff]
        %v1168 = vld [vmem:[%s760 + $0x32] sm:$0xff]
        %v1169 = vld [vmem:[%s760 + $0x42] sm:$0xff]
        %v1170 = vld [vmem:[%s760 + $0x52] sm:$0xff]
        %v1171 = vld [vmem:[%s760 + $0x62] sm:$0xff]
        %v1172 = vld [vmem:[%s760 + $0x72] sm:$0xff]
        %v1173 = vld [vmem:[%s760 + $0xa2] sm:$0xff]
        %v1174 = vld [vmem:[%s760 + $0xb2] sm:$0xff]
        %v1175 = vld [vmem:[%s760 + $0xc2] sm:$0xff]
        %v1176 = vld [vmem:[%s760 + $0xd2] sm:$0xff]
        %v1177 = vld [vmem:[%s760 + $0xe2] sm:$0xff]
        %v1178 = vld [vmem:[%s760 + $0xf2] sm:$0xff]
        %v1179 = vld [vmem:[%s760 + $0x102] sm:$0xff]
        %v1180 = vld [vmem:[%s760 + $0x112] sm:$0xff]
        %v1181 = vpack.c.bf16 %v1166, %v1165
        %v1182 = vpack.c.bf16 %v1168, %v1167
        %v1183 = vpack.c.bf16 %v1170, %v1169
        %v1184 = vpack.c.bf16 %v1172, %v1171
        %v1185 = vpack.c.bf16 %v1174, %v1173
        %v1186 = vpack.c.bf16 %v1176, %v1175
        %v1187 = vpack.c.bf16 %v1178, %v1177
        %v1188 = vpack.c.bf16 %v1180, %v1179
        %s1189 = scalar_lea.vmem %s1, 320
        %v1190 = vld [vmem:[%s1189] sm:$0xf]
        %v1191 = vld [vmem:[%s1189 + $0x4] sm:$0xf]
        %v1192 = vld [vmem:[%s1189 + $0x8] sm:$0xf]
        %v1193 = vld [vmem:[%s1189 + $0xc] sm:$0xf]
        %v1194 = vld [vmem:[%s1189 + $0x10] sm:$0xf]
        %v1195 = vld [vmem:[%s1189 + $0x14] sm:$0xf]
        %v1196 = vld [vmem:[%s1189 + $0x18] sm:$0xf]
        %v1197 = vld [vmem:[%s1189 + $0x1c] sm:$0xf]
        %v1198 = vld [vmem:[%s1189 + $0x20] sm:$0xf]
        %v1199 = vld [vmem:[%s1189 + $0x24] sm:$0xf]
        %v1200 = vld [vmem:[%s1189 + $0x28] sm:$0xf]
        %v1201 = vld [vmem:[%s1189 + $0x2c] sm:$0xf]
        %v1202 = vld [vmem:[%s1189 + $0x30] sm:$0xf]
        %v1203 = vld [vmem:[%s1189 + $0x34] sm:$0xf]
        %v1204 = vld [vmem:[%s1189 + $0x38] sm:$0xf]
        %v1205 = vld [vmem:[%s1189 + $0x3c] sm:$0xf]
        %v1222 = vunpack.c.l.b16 %v1190
        %v1223 = vunpack.c.l.b16 %v1191
        %v1224 = vunpack.c.l.b16 %v1192
        %v1225 = vunpack.c.l.b16 %v1193
        %v1226 = vunpack.c.l.b16 %v1194
        %v1227 = vunpack.c.l.b16 %v1195
        %v1228 = vunpack.c.l.b16 %v1196
        %v1229 = vunpack.c.l.b16 %v1197
        %v1230 = vunpack.c.l.b16 %v1198
        %v1231 = vunpack.c.l.b16 %v1199
        %v1232 = vunpack.c.l.b16 %v1200
        %v1233 = vunpack.c.l.b16 %v1201
        %v1234 = vunpack.c.l.b16 %v1202
        %v1235 = vunpack.c.l.b16 %v1203
        %v1236 = vunpack.c.l.b16 %v1204
        %v1237 = vunpack.c.l.b16 %v1205
        %v1238 = vpack.c.b16 %v1223, %v1222
        %v1239 = vpack.c.b16 %v1225, %v1224
        %v1240 = vpack.c.b16 %v1227, %v1226
        %v1241 = vpack.c.b16 %v1229, %v1228
        %v1242 = vpack.c.b16 %v1231, %v1230
        %v1243 = vpack.c.b16 %v1233, %v1232
        %v1244 = vpack.c.b16 %v1235, %v1234
        %v1245 = vpack.c.b16 %v1237, %v1236
        %1254 = vmatprep.subr.bf16.mxu0 0
        %1255 = vmatpush1.bf16.msra.mxu0 %v1238
        %1256 = vmatprep.subr.bf16.mxu0 0
        %1257 = vmatpush1.bf16.msra.mxu0 %v1239
        %1258 = vmatprep.subr.bf16.mxu0 0
        %1259 = vmatpush1.bf16.msra.mxu0 %v1240
        %1260 = vmatprep.subr.bf16.mxu0 0
        %1261 = vmatpush1.bf16.msra.mxu0 %v1241
        %1262 = vmatprep.subr.bf16.mxu0 0
        %1263 = vmatpush1.bf16.msra.mxu0 %v1242
        %1264 = vmatprep.subr.bf16.mxu0 0
        %1265 = vmatpush1.bf16.msra.mxu0 %v1243
        %1266 = vmatprep.subr.bf16.mxu0 0
        %1267 = vmatpush1.bf16.msra.mxu0 %v1244
        %1268 = vmatprep.subr.bf16.mxu0 0
        %1269 = vmatpush1.bf16.msra.mxu0 %v1245
        %1270 = vmatprep.subr.bf16.mxu0 0
        %1271 = vmatpush1.bf16.msra.mxu0 0
        %1272 = vmatprep.subr.bf16.mxu0 0
        %1273 = vmatpush1.bf16.msra.mxu0 0
        %1274 = vmatprep.subr.bf16.mxu0 0
        %1275 = vmatpush1.bf16.msra.mxu0 0
        %1276 = vmatprep.subr.bf16.mxu0 0
        %1277 = vmatpush1.bf16.msra.mxu0 0
        %1278 = vmatprep.subr.bf16.mxu0 0
        %1279 = vmatpush1.bf16.msra.mxu0 0
        %1280 = vmatprep.subr.bf16.mxu0 0
        %1281 = vmatpush1.bf16.msra.mxu0 0
        %1282 = vmatprep.subr.bf16.mxu0 0
        %1283 = vmatpush1.bf16.msra.mxu0 0
        %1284 = vmatprep.subr.bf16.mxu0 0
        %1285 = vmatpush1.bf16.msra.mxu0 0
        %1286 = vmatprep.mubr.bf16.mxu0 0
        %1287 = vmatmul.mubr.bf16.gmra.mrb[0].mxu0 %v1181
        %v1288 = vpop.f32.mrb[0].mxu0
        %v1289 = vadd.f32 0.0, %v1288
        %v1290 = vpop.f32.mrb[0].mxu0
        %v1291 = vpop.f32.mrb[0].mxu0
        %v1292 = vadd.f32 0.0, %v1291
        %v1293 = vpop.f32.mrb[0].mxu0
        %1294 = vmatprep.mubr.bf16.mxu0 0
        %1295 = vmatmul.mubr.bf16.gmra.mrb[0].mxu0 %v1182
        %v1296 = vpop.f32.mrb[0].mxu0
        %v1297 = vadd.f32 0.0, %v1296
        %v1298 = vpop.f32.mrb[0].mxu0
        %v1299 = vpop.f32.mrb[0].mxu0
        %v1300 = vadd.f32 0.0, %v1299
        %v1301 = vpop.f32.mrb[0].mxu0
        %1302 = vmatprep.mubr.bf16.mxu0 0
        %1303 = vmatmul.mubr.bf16.gmra.mrb[0].mxu0 %v1183
        %v1304 = vpop.f32.mrb[0].mxu0
        %v1305 = vadd.f32 0.0, %v1304
        %v1306 = vpop.f32.mrb[0].mxu0
        %v1307 = vpop.f32.mrb[0].mxu0
        %v1308 = vadd.f32 0.0, %v1307
        %v1309 = vpop.f32.mrb[0].mxu0
        %1310 = vmatprep.mubr.bf16.mxu0 0
        %1311 = vmatmul.mubr.bf16.gmra.mrb[0].mxu0 %v1184
        %v1312 = vpop.f32.mrb[0].mxu0
        %v1313 = vadd.f32 0.0, %v1312
        %v1314 = vpop.f32.mrb[0].mxu0
        %v1315 = vpop.f32.mrb[0].mxu0
        %v1316 = vadd.f32 0.0, %v1315
        %v1317 = vpop.f32.mrb[0].mxu0
        %1318 = vmatprep.mubr.bf16.mxu0 0
        %1319 = vmatmul.mubr.bf16.gmra.mrb[0].mxu0 %v1185
        %v1320 = vpop.f32.mrb[0].mxu0
        %v1321 = vadd.f32 0.0, %v1320
        %v1322 = vpop.f32.mrb[0].mxu0
        %v1323 = vpop.f32.mrb[0].mxu0
        %v1324 = vadd.f32 0.0, %v1323
        %v1325 = vpop.f32.mrb[0].mxu0
        %1326 = vmatprep.mubr.bf16.mxu0 0
        %1327 = vmatmul.mubr.bf16.gmra.mrb[0].mxu0 %v1186
        %v1328 = vpop.f32.mrb[0].mxu0
        %v1329 = vadd.f32 0.0, %v1328
        %v1330 = vpop.f32.mrb[0].mxu0
        %v1331 = vpop.f32.mrb[0].mxu0
        %v1332 = vadd.f32 0.0, %v1331
        %v1333 = vpop.f32.mrb[0].mxu0
        %1334 = vmatprep.mubr.bf16.mxu0 0
        %1335 = vmatmul.mubr.bf16.gmra.mrb[0].mxu0 %v1187
        %v1336 = vpop.f32.mrb[0].mxu0
        %v1337 = vadd.f32 0.0, %v1336
        %v1338 = vpop.f32.mrb[0].mxu0
        %v1339 = vpop.f32.mrb[0].mxu0
        %v1340 = vadd.f32 0.0, %v1339
        %v1341 = vpop.f32.mrb[0].mxu0
        %1342 = vmatprep.mubr.bf16.mxu0 0
        %1343 = vmatmul.mubr.bf16.gmra.mrb[0].mxu0 %v1188
        %v1344 = vpop.f32.mrb[0].mxu0
        %v1345 = vadd.f32 0.0, %v1344
        %v1346 = vpop.f32.mrb[0].mxu0
        %v1347 = vpop.f32.mrb[0].mxu0
        %v1348 = vadd.f32 0.0, %v1347
        %v1349 = vpop.f32.mrb[0].mxu0
        %1350 = vdwg.mxu0
        %v1351 = vadd.f32 %v1149, %v1289
        %v1352 = vadd.f32 %v1150, %v1292
        %v1353 = vadd.f32 %v1151, %v1297
        %v1354 = vadd.f32 %v1152, %v1300
        %v1355 = vadd.f32 %v1153, %v1305
        %v1356 = vadd.f32 %v1154, %v1308
        %v1357 = vadd.f32 %v1155, %v1313
        %v1358 = vadd.f32 %v1156, %v1316
        %v1359 = vadd.f32 %v1157, %v1321
        %v1360 = vadd.f32 %v1158, %v1324
        %v1361 = vadd.f32 %v1159, %v1329
        %v1362 = vadd.f32 %v1160, %v1332
        %v1363 = vadd.f32 %v1161, %v1337
        %v1364 = vadd.f32 %v1162, %v1340
        %v1365 = vadd.f32 %v1163, %v1345
        %v1366 = vadd.f32 %v1164, %v1348
        %s1367 = scalar_lea.vmem %s183, 32
        %v1368 = vld [vmem:[%s1367] sm:$0xff]
        %v1369 = vld [vmem:[%s1367 + $0x10] sm:$0xff]
        %v1370 = vld [vmem:[%s1367 + $0x20] sm:$0xff]
        %v1371 = vld [vmem:[%s1367 + $0x30] sm:$0xff]
        %v1372 = vld [vmem:[%s1367 + $0x40] sm:$0xff]
        %v1373 = vld [vmem:[%s1367 + $0x50] sm:$0xff]
        %v1374 = vld [vmem:[%s1367 + $0x60] sm:$0xff]
        %v1375 = vld [vmem:[%s1367 + $0x70] sm:$0xff]
        %v1376 = vld [vmem:[%s1367 + $0xa0] sm:$0xff]
        %v1377 = vld [vmem:[%s1367 + $0xb0] sm:$0xff]
        %v1378 = vld [vmem:[%s1367 + $0xc0] sm:$0xff]
        %v1379 = vld [vmem:[%s1367 + $0xd0] sm:$0xff]
        %v1380 = vld [vmem:[%s1367 + $0xe0] sm:$0xff]
        %v1381 = vld [vmem:[%s1367 + $0xf0] sm:$0xff]
        %v1382 = vld [vmem:[%s1367 + $0x100] sm:$0xff]
        %v1383 = vld [vmem:[%s1367 + $0x110] sm:$0xff]
        %v1384 = vpack.c.bf16 %v1369, %v1368
        %v1385 = vpack.c.bf16 %v1371, %v1370
        %v1386 = vpack.c.bf16 %v1373, %v1372
        %v1387 = vpack.c.bf16 %v1375, %v1374
        %v1388 = vpack.c.bf16 %v1377, %v1376
        %v1389 = vpack.c.bf16 %v1379, %v1378
        %v1390 = vpack.c.bf16 %v1381, %v1380
        %v1391 = vpack.c.bf16 %v1383, %v1382
        %s1392 = scalar_lea.vmem %s1, 384
        %v1393 = vld [vmem:[%s1392] sm:$0xf]
        %v1394 = vld [vmem:[%s1392 + $0x4] sm:$0xf]
        %v1395 = vld [vmem:[%s1392 + $0x8] sm:$0xf]
        %v1396 = vld [vmem:[%s1392 + $0xc] sm:$0xf]
        %v1397 = vld [vmem:[%s1392 + $0x10] sm:$0xf]
        %v1398 = vld [vmem:[%s1392 + $0x14] sm:$0xf]
        %v1399 = vld [vmem:[%s1392 + $0x18] sm:$0xf]
        %v1400 = vld [vmem:[%s1392 + $0x1c] sm:$0xf]
        %v1401 = vld [vmem:[%s1392 + $0x20] sm:$0xf]
        %v1402 = vld [vmem:[%s1392 + $0x24] sm:$0xf]
        %v1403 = vld [vmem:[%s1392 + $0x28] sm:$0xf]
        %v1404 = vld [vmem:[%s1392 + $0x2c] sm:$0xf]
        %v1405 = vld [vmem:[%s1392 + $0x30] sm:$0xf]
        %v1406 = vld [vmem:[%s1392 + $0x34] sm:$0xf]
        %v1407 = vld [vmem:[%s1392 + $0x38] sm:$0xf]
        %v1408 = vld [vmem:[%s1392 + $0x3c] sm:$0xf]
        %v1425 = vunpack.c.l.b16 %v1393
        %v1426 = vunpack.c.l.b16 %v1394
        %v1427 = vunpack.c.l.b16 %v1395
        %v1428 = vunpack.c.l.b16 %v1396
        %v1429 = vunpack.c.l.b16 %v1397
        %v1430 = vunpack.c.l.b16 %v1398
        %v1431 = vunpack.c.l.b16 %v1399
        %v1432 = vunpack.c.l.b16 %v1400
        %v1433 = vunpack.c.l.b16 %v1401
        %v1434 = vunpack.c.l.b16 %v1402
        %v1435 = vunpack.c.l.b16 %v1403
        %v1436 = vunpack.c.l.b16 %v1404
        %v1437 = vunpack.c.l.b16 %v1405
        %v1438 = vunpack.c.l.b16 %v1406
        %v1439 = vunpack.c.l.b16 %v1407
        %v1440 = vunpack.c.l.b16 %v1408
        %v1441 = vpack.c.b16 %v1426, %v1425
        %v1442 = vpack.c.b16 %v1428, %v1427
        %v1443 = vpack.c.b16 %v1430, %v1429
        %v1444 = vpack.c.b16 %v1432, %v1431
        %v1445 = vpack.c.b16 %v1434, %v1433
        %v1446 = vpack.c.b16 %v1436, %v1435
        %v1447 = vpack.c.b16 %v1438, %v1437
        %v1448 = vpack.c.b16 %v1440, %v1439
        %1457 = vmatprep.subr.bf16.mxu0 0
        %1458 = vmatpush1.bf16.msra.mxu0 %v1441
        %1459 = vmatprep.subr.bf16.mxu0 0
        %1460 = vmatpush1.bf16.msra.mxu0 %v1442
        %1461 = vmatprep.subr.bf16.mxu0 0
        %1462 = vmatpush1.bf16.msra.mxu0 %v1443
        %1463 = vmatprep.subr.bf16.mxu0 0
        %1464 = vmatpush1.bf16.msra.mxu0 %v1444
        %1465 = vmatprep.subr.bf16.mxu0 0
        %1466 = vmatpush1.bf16.msra.mxu0 %v1445
        %1467 = vmatprep.subr.bf16.mxu0 0
        %1468 = vmatpush1.bf16.msra.mxu0 %v1446
        %1469 = vmatprep.subr.bf16.mxu0 0
        %1470 = vmatpush1.bf16.msra.mxu0 %v1447
        %1471 = vmatprep.subr.bf16.mxu0 0
        %1472 = vmatpush1.bf16.msra.mxu0 %v1448
        %1473 = vmatprep.subr.bf16.mxu0 0
        %1474 = vmatpush1.bf16.msra.mxu0 0
        %1475 = vmatprep.subr.bf16.mxu0 0
        %1476 = vmatpush1.bf16.msra.mxu0 0
        %1477 = vmatprep.subr.bf16.mxu0 0
        %1478 = vmatpush1.bf16.msra.mxu0 0
        %1479 = vmatprep.subr.bf16.mxu0 0
        %1480 = vmatpush1.bf16.msra.mxu0 0
        %1481 = vmatprep.subr.bf16.mxu0 0
        %1482 = vmatpush1.bf16.msra.mxu0 0
        %1483 = vmatprep.subr.bf16.mxu0 0
        %1484 = vmatpush1.bf16.msra.mxu0 0
        %1485 = vmatprep.subr.bf16.mxu0 0
        %1486 = vmatpush1.bf16.msra.mxu0 0
        %1487 = vmatprep.subr.bf16.mxu0 0
        %1488 = vmatpush1.bf16.msra.mxu0 0
        %1489 = vmatprep.mubr.bf16.mxu0 0
        %1490 = vmatmul.mubr.bf16.gmra.mrb[0].mxu0 %v1384
        %v1491 = vpop.f32.mrb[0].mxu0
        %v1492 = vadd.f32 0.0, %v1491
        %v1493 = vpop.f32.mrb[0].mxu0
        %v1494 = vpop.f32.mrb[0].mxu0
        %v1495 = vadd.f32 0.0, %v1494
        %v1496 = vpop.f32.mrb[0].mxu0
        %1497 = vmatprep.mubr.bf16.mxu0 0
        %1498 = vmatmul.mubr.bf16.gmra.mrb[0].mxu0 %v1385
        %v1499 = vpop.f32.mrb[0].mxu0
        %v1500 = vadd.f32 0.0, %v1499
        %v1501 = vpop.f32.mrb[0].mxu0
        %v1502 = vpop.f32.mrb[0].mxu0
        %v1503 = vadd.f32 0.0, %v1502
        %v1504 = vpop.f32.mrb[0].mxu0
        %1505 = vmatprep.mubr.bf16.mxu0 0
        %1506 = vmatmul.mubr.bf16.gmra.mrb[0].mxu0 %v1386
        %v1507 = vpop.f32.mrb[0].mxu0
        %v1508 = vadd.f32 0.0, %v1507
        %v1509 = vpop.f32.mrb[0].mxu0
        %v1510 = vpop.f32.mrb[0].mxu0
        %v1511 = vadd.f32 0.0, %v1510
        %v1512 = vpop.f32.mrb[0].mxu0
        %1513 = vmatprep.mubr.bf16.mxu0 0
        %1514 = vmatmul.mubr.bf16.gmra.mrb[0].mxu0 %v1387
        %v1515 = vpop.f32.mrb[0].mxu0
        %v1516 = vadd.f32 0.0, %v1515
        %v1517 = vpop.f32.mrb[0].mxu0
        %v1518 = vpop.f32.mrb[0].mxu0
        %v1519 = vadd.f32 0.0, %v1518
        %v1520 = vpop.f32.mrb[0].mxu0
        %1521 = vmatprep.mubr.bf16.mxu0 0
        %1522 = vmatmul.mubr.bf16.gmra.mrb[0].mxu0 %v1388
        %v1523 = vpop.f32.mrb[0].mxu0
        %v1524 = vadd.f32 0.0, %v1523
        %v1525 = vpop.f32.mrb[0].mxu0
        %v1526 = vpop.f32.mrb[0].mxu0
        %v1527 = vadd.f32 0.0, %v1526
        %v1528 = vpop.f32.mrb[0].mxu0
        %1529 = vmatprep.mubr.bf16.mxu0 0
        %1530 = vmatmul.mubr.bf16.gmra.mrb[0].mxu0 %v1389
        %v1531 = vpop.f32.mrb[0].mxu0
        %v1532 = vadd.f32 0.0, %v1531
        %v1533 = vpop.f32.mrb[0].mxu0
        %v1534 = vpop.f32.mrb[0].mxu0
        %v1535 = vadd.f32 0.0, %v1534
        %v1536 = vpop.f32.mrb[0].mxu0
        %1537 = vmatprep.mubr.bf16.mxu0 0
        %1538 = vmatmul.mubr.bf16.gmra.mrb[0].mxu0 %v1390
        %v1539 = vpop.f32.mrb[0].mxu0
        %v1540 = vadd.f32 0.0, %v1539
        %v1541 = vpop.f32.mrb[0].mxu0
        %v1542 = vpop.f32.mrb[0].mxu0
        %v1543 = vadd.f32 0.0, %v1542
        %v1544 = vpop.f32.mrb[0].mxu0
        %1545 = vmatprep.mubr.bf16.mxu0 0
        %1546 = vmatmul.mubr.bf16.gmra.mrb[0].mxu0 %v1391
        %v1547 = vpop.f32.mrb[0].mxu0
        %v1548 = vadd.f32 0.0, %v1547
        %v1549 = vpop.f32.mrb[0].mxu0
        %v1550 = vpop.f32.mrb[0].mxu0
        %v1551 = vadd.f32 0.0, %v1550
        %v1552 = vpop.f32.mrb[0].mxu0
        %1553 = vdwg.mxu0
        %v1554 = vadd.f32 %v1351, %v1492
        %v1555 = vadd.f32 %v1352, %v1495
        %v1556 = vadd.f32 %v1353, %v1500
        %v1557 = vadd.f32 %v1354, %v1503
        %v1558 = vadd.f32 %v1355, %v1508
        %v1559 = vadd.f32 %v1356, %v1511
        %v1560 = vadd.f32 %v1357, %v1516
        %v1561 = vadd.f32 %v1358, %v1519
        %v1562 = vadd.f32 %v1359, %v1524
        %v1563 = vadd.f32 %v1360, %v1527
        %v1564 = vadd.f32 %v1361, %v1532
        %v1565 = vadd.f32 %v1362, %v1535
        %v1566 = vadd.f32 %v1363, %v1540
        %v1567 = vadd.f32 %v1364, %v1543
        %v1568 = vadd.f32 %v1365, %v1548
        %v1569 = vadd.f32 %v1366, %v1551
        %v1570 = vld [vmem:[%s1367 + $0x1] sm:$0xff]
        %v1571 = vld [vmem:[%s1367 + $0x11] sm:$0xff]
        %v1572 = vld [vmem:[%s1367 + $0x21] sm:$0xff]
        %v1573 = vld [vmem:[%s1367 + $0x31] sm:$0xff]
        %v1574 = vld [vmem:[%s1367 + $0x41] sm:$0xff]
        %v1575 = vld [vmem:[%s1367 + $0x51] sm:$0xff]
        %v1576 = vld [vmem:[%s1367 + $0x61] sm:$0xff]
        %v1577 = vld [vmem:[%s1367 + $0x71] sm:$0xff]
        %v1578 = vld [vmem:[%s1367 + $0xa1] sm:$0xff]
        %v1579 = vld [vmem:[%s1367 + $0xb1] sm:$0xff]
        %v1580 = vld [vmem:[%s1367 + $0xc1] sm:$0xff]
        %v1581 = vld [vmem:[%s1367 + $0xd1] sm:$0xff]
        %v1582 = vld [vmem:[%s1367 + $0xe1] sm:$0xff]
        %v1583 = vld [vmem:[%s1367 + $0xf1] sm:$0xff]
        %v1584 = vld [vmem:[%s1367 + $0x101] sm:$0xff]
        %v1585 = vld [vmem:[%s1367 + $0x111] sm:$0xff]
        %v1586 = vpack.c.bf16 %v1571, %v1570
        %v1587 = vpack.c.bf16 %v1573, %v1572
        %v1588 = vpack.c.bf16 %v1575, %v1574
        %v1589 = vpack.c.bf16 %v1577, %v1576
        %v1590 = vpack.c.bf16 %v1579, %v1578
        %v1591 = vpack.c.bf16 %v1581, %v1580
        %v1592 = vpack.c.bf16 %v1583, %v1582
        %v1593 = vpack.c.bf16 %v1585, %v1584
        %s1594 = scalar_lea.vmem %s1, 448
        %v1595 = vld [vmem:[%s1594] sm:$0xf]
        %v1596 = vld [vmem:[%s1594 + $0x4] sm:$0xf]
        %v1597 = vld [vmem:[%s1594 + $0x8] sm:$0xf]
        %v1598 = vld [vmem:[%s1594 + $0xc] sm:$0xf]
        %v1599 = vld [vmem:[%s1594 + $0x10] sm:$0xf]
        %v1600 = vld [vmem:[%s1594 + $0x14] sm:$0xf]
        %v1601 = vld [vmem:[%s1594 + $0x18] sm:$0xf]
        %v1602 = vld [vmem:[%s1594 + $0x1c] sm:$0xf]
        %v1603 = vld [vmem:[%s1594 + $0x20] sm:$0xf]
        %v1604 = vld [vmem:[%s1594 + $0x24] sm:$0xf]
        %v1605 = vld [vmem:[%s1594 + $0x28] sm:$0xf]
        %v1606 = vld [vmem:[%s1594 + $0x2c] sm:$0xf]
        %v1607 = vld [vmem:[%s1594 + $0x30] sm:$0xf]
        %v1608 = vld [vmem:[%s1594 + $0x34] sm:$0xf]
        %v1609 = vld [vmem:[%s1594 + $0x38] sm:$0xf]
        %v1610 = vld [vmem:[%s1594 + $0x3c] sm:$0xf]
        %v1627 = vunpack.c.l.b16 %v1595
        %v1628 = vunpack.c.l.b16 %v1596
        %v1629 = vunpack.c.l.b16 %v1597
        %v1630 = vunpack.c.l.b16 %v1598
        %v1631 = vunpack.c.l.b16 %v1599
        %v1632 = vunpack.c.l.b16 %v1600
        %v1633 = vunpack.c.l.b16 %v1601
        %v1634 = vunpack.c.l.b16 %v1602
        %v1635 = vunpack.c.l.b16 %v1603
        %v1636 = vunpack.c.l.b16 %v1604
        %v1637 = vunpack.c.l.b16 %v1605
        %v1638 = vunpack.c.l.b16 %v1606
        %v1639 = vunpack.c.l.b16 %v1607
        %v1640 = vunpack.c.l.b16 %v1608
        %v1641 = vunpack.c.l.b16 %v1609
        %v1642 = vunpack.c.l.b16 %v1610
        %v1643 = vpack.c.b16 %v1628, %v1627
        %v1644 = vpack.c.b16 %v1630, %v1629
        %v1645 = vpack.c.b16 %v1632, %v1631
        %v1646 = vpack.c.b16 %v1634, %v1633
        %v1647 = vpack.c.b16 %v1636, %v1635
        %v1648 = vpack.c.b16 %v1638, %v1637
        %v1649 = vpack.c.b16 %v1640, %v1639
        %v1650 = vpack.c.b16 %v1642, %v1641
        %1659 = vmatprep.subr.bf16.mxu0 0
        %1660 = vmatpush1.bf16.msra.mxu0 %v1643
        %1661 = vmatprep.subr.bf16.mxu0 0
        %1662 = vmatpush1.bf16.msra.mxu0 %v1644
        %1663 = vmatprep.subr.bf16.mxu0 0
        %1664 = vmatpush1.bf16.msra.mxu0 %v1645
        %1665 = vmatprep.subr.bf16.mxu0 0
        %1666 = vmatpush1.bf16.msra.mxu0 %v1646
        %1667 = vmatprep.subr.bf16.mxu0 0
        %1668 = vmatpush1.bf16.msra.mxu0 %v1647
        %1669 = vmatprep.subr.bf16.mxu0 0
        %1670 = vmatpush1.bf16.msra.mxu0 %v1648
        %1671 = vmatprep.subr.bf16.mxu0 0
        %1672 = vmatpush1.bf16.msra.mxu0 %v1649
        %1673 = vmatprep.subr.bf16.mxu0 0
        %1674 = vmatpush1.bf16.msra.mxu0 %v1650
        %1675 = vmatprep.subr.bf16.mxu0 0
        %1676 = vmatpush1.bf16.msra.mxu0 0
        %1677 = vmatprep.subr.bf16.mxu0 0
        %1678 = vmatpush1.bf16.msra.mxu0 0
        %1679 = vmatprep.subr.bf16.mxu0 0
        %1680 = vmatpush1.bf16.msra.mxu0 0
        %1681 = vmatprep.subr.bf16.mxu0 0
        %1682 = vmatpush1.bf16.msra.mxu0 0
        %1683 = vmatprep.subr.bf16.mxu0 0
        %1684 = vmatpush1.bf16.msra.mxu0 0
        %1685 = vmatprep.subr.bf16.mxu0 0
        %1686 = vmatpush1.bf16.msra.mxu0 0
        %1687 = vmatprep.subr.bf16.mxu0 0
        %1688 = vmatpush1.bf16.msra.mxu0 0
        %1689 = vmatprep.subr.bf16.mxu0 0
        %1690 = vmatpush1.bf16.msra.mxu0 0
        %1691 = vmatprep.mubr.bf16.mxu0 0
        %1692 = vmatmul.mubr.bf16.gmra.mrb[0].mxu0 %v1586
        %v1693 = vpop.f32.mrb[0].mxu0
        %v1694 = vadd.f32 0.0, %v1693
        %v1695 = vpop.f32.mrb[0].mxu0
        %v1696 = vpop.f32.mrb[0].mxu0
        %v1697 = vadd.f32 0.0, %v1696
        %v1698 = vpop.f32.mrb[0].mxu0
        %1699 = vmatprep.mubr.bf16.mxu0 0
        %1700 = vmatmul.mubr.bf16.gmra.mrb[0].mxu0 %v1587
        %v1701 = vpop.f32.mrb[0].mxu0
        %v1702 = vadd.f32 0.0, %v1701
        %v1703 = vpop.f32.mrb[0].mxu0
        %v1704 = vpop.f32.mrb[0].mxu0
        %v1705 = vadd.f32 0.0, %v1704
        %v1706 = vpop.f32.mrb[0].mxu0
        %1707 = vmatprep.mubr.bf16.mxu0 0
        %1708 = vmatmul.mubr.bf16.gmra.mrb[0].mxu0 %v1588
        %v1709 = vpop.f32.mrb[0].mxu0
        %v1710 = vadd.f32 0.0, %v1709
        %v1711 = vpop.f32.mrb[0].mxu0
        %v1712 = vpop.f32.mrb[0].mxu0
        %v1713 = vadd.f32 0.0, %v1712
        %v1714 = vpop.f32.mrb[0].mxu0
        %1715 = vmatprep.mubr.bf16.mxu0 0
        %1716 = vmatmul.mubr.bf16.gmra.mrb[0].mxu0 %v1589
        %v1717 = vpop.f32.mrb[0].mxu0
        %v1718 = vadd.f32 0.0, %v1717
        %v1719 = vpop.f32.mrb[0].mxu0
        %v1720 = vpop.f32.mrb[0].mxu0
        %v1721 = vadd.f32 0.0, %v1720
        %v1722 = vpop.f32.mrb[0].mxu0
        %1723 = vmatprep.mubr.bf16.mxu0 0
        %1724 = vmatmul.mubr.bf16.gmra.mrb[0].mxu0 %v1590
        %v1725 = vpop.f32.mrb[0].mxu0
        %v1726 = vadd.f32 0.0, %v1725
        %v1727 = vpop.f32.mrb[0].mxu0
        %v1728 = vpop.f32.mrb[0].mxu0
        %v1729 = vadd.f32 0.0, %v1728
        %v1730 = vpop.f32.mrb[0].mxu0
        %1731 = vmatprep.mubr.bf16.mxu0 0
        %1732 = vmatmul.mubr.bf16.gmra.mrb[0].mxu0 %v1591
        %v1733 = vpop.f32.mrb[0].mxu0
        %v1734 = vadd.f32 0.0, %v1733
        %v1735 = vpop.f32.mrb[0].mxu0
        %v1736 = vpop.f32.mrb[0].mxu0
        %v1737 = vadd.f32 0.0, %v1736
        %v1738 = vpop.f32.mrb[0].mxu0
        %1739 = vmatprep.mubr.bf16.mxu0 0
        %1740 = vmatmul.mubr.bf16.gmra.mrb[0].mxu0 %v1592
        %v1741 = vpop.f32.mrb[0].mxu0
        %v1742 = vadd.f32 0.0, %v1741
        %v1743 = vpop.f32.mrb[0].mxu0
        %v1744 = vpop.f32.mrb[0].mxu0
        %v1745 = vadd.f32 0.0, %v1744
        %v1746 = vpop.f32.mrb[0].mxu0
        %1747 = vmatprep.mubr.bf16.mxu0 0
        %1748 = vmatmul.mubr.bf16.gmra.mrb[0].mxu0 %v1593
        %v1749 = vpop.f32.mrb[0].mxu0
        %v1750 = vadd.f32 0.0, %v1749
        %v1751 = vpop.f32.mrb[0].mxu0
        %v1752 = vpop.f32.mrb[0].mxu0
        %v1753 = vadd.f32 0.0, %v1752
        %v1754 = vpop.f32.mrb[0].mxu0
        %1755 = vdwg.mxu0
        %v1756 = vadd.f32 %v1554, %v1694
        %v1757 = vadd.f32 %v1555, %v1697
        %v1758 = vadd.f32 %v1556, %v1702
        %v1759 = vadd.f32 %v1557, %v1705
        %v1760 = vadd.f32 %v1558, %v1710
        %v1761 = vadd.f32 %v1559, %v1713
        %v1762 = vadd.f32 %v1560, %v1718
        %v1763 = vadd.f32 %v1561, %v1721
        %v1764 = vadd.f32 %v1562, %v1726
        %v1765 = vadd.f32 %v1563, %v1729
        %v1766 = vadd.f32 %v1564, %v1734
        %v1767 = vadd.f32 %v1565, %v1737
        %v1768 = vadd.f32 %v1566, %v1742
        %v1769 = vadd.f32 %v1567, %v1745
        %v1770 = vadd.f32 %v1568, %v1750
        %v1771 = vadd.f32 %v1569, %v1753
        %v1772 = vld [vmem:[%s1367 + $0x2] sm:$0xff]
        %v1773 = vld [vmem:[%s1367 + $0x12] sm:$0xff]
        %v1774 = vld [vmem:[%s1367 + $0x22] sm:$0xff]
        %v1775 = vld [vmem:[%s1367 + $0x32] sm:$0xff]
        %v1776 = vld [vmem:[%s1367 + $0x42] sm:$0xff]
        %v1777 = vld [vmem:[%s1367 + $0x52] sm:$0xff]
        %v1778 = vld [vmem:[%s1367 + $0x62] sm:$0xff]
        %v1779 = vld [vmem:[%s1367 + $0x72] sm:$0xff]
        %v1780 = vld [vmem:[%s1367 + $0xa2] sm:$0xff]
        %v1781 = vld [vmem:[%s1367 + $0xb2] sm:$0xff]
        %v1782 = vld [vmem:[%s1367 + $0xc2] sm:$0xff]
        %v1783 = vld [vmem:[%s1367 + $0xd2] sm:$0xff]
        %v1784 = vld [vmem:[%s1367 + $0xe2] sm:$0xff]
        %v1785 = vld [vmem:[%s1367 + $0xf2] sm:$0xff]
        %v1786 = vld [vmem:[%s1367 + $0x102] sm:$0xff]
        %v1787 = vld [vmem:[%s1367 + $0x112] sm:$0xff]
        %v1788 = vpack.c.bf16 %v1773, %v1772
        %v1789 = vpack.c.bf16 %v1775, %v1774
        %v1790 = vpack.c.bf16 %v1777, %v1776
        %v1791 = vpack.c.bf16 %v1779, %v1778
        %v1792 = vpack.c.bf16 %v1781, %v1780
        %v1793 = vpack.c.bf16 %v1783, %v1782
        %v1794 = vpack.c.bf16 %v1785, %v1784
        %v1795 = vpack.c.bf16 %v1787, %v1786
        %s1796 = scalar_lea.vmem %s1, 512
        %v1797 = vld [vmem:[%s1796] sm:$0xf]
        %v1798 = vld [vmem:[%s1796 + $0x4] sm:$0xf]
        %v1799 = vld [vmem:[%s1796 + $0x8] sm:$0xf]
        %v1800 = vld [vmem:[%s1796 + $0xc] sm:$0xf]
        %v1801 = vld [vmem:[%s1796 + $0x10] sm:$0xf]
        %v1802 = vld [vmem:[%s1796 + $0x14] sm:$0xf]
        %v1803 = vld [vmem:[%s1796 + $0x18] sm:$0xf]
        %v1804 = vld [vmem:[%s1796 + $0x1c] sm:$0xf]
        %v1805 = vld [vmem:[%s1796 + $0x20] sm:$0xf]
        %v1806 = vld [vmem:[%s1796 + $0x24] sm:$0xf]
        %v1807 = vld [vmem:[%s1796 + $0x28] sm:$0xf]
        %v1808 = vld [vmem:[%s1796 + $0x2c] sm:$0xf]
        %v1809 = vld [vmem:[%s1796 + $0x30] sm:$0xf]
        %v1810 = vld [vmem:[%s1796 + $0x34] sm:$0xf]
        %v1811 = vld [vmem:[%s1796 + $0x38] sm:$0xf]
        %v1812 = vld [vmem:[%s1796 + $0x3c] sm:$0xf]
        %v1829 = vunpack.c.l.b16 %v1797
        %v1830 = vunpack.c.l.b16 %v1798
        %v1831 = vunpack.c.l.b16 %v1799
        %v1832 = vunpack.c.l.b16 %v1800
        %v1833 = vunpack.c.l.b16 %v1801
        %v1834 = vunpack.c.l.b16 %v1802
        %v1835 = vunpack.c.l.b16 %v1803
        %v1836 = vunpack.c.l.b16 %v1804
        %v1837 = vunpack.c.l.b16 %v1805
        %v1838 = vunpack.c.l.b16 %v1806
        %v1839 = vunpack.c.l.b16 %v1807
        %v1840 = vunpack.c.l.b16 %v1808
        %v1841 = vunpack.c.l.b16 %v1809
        %v1842 = vunpack.c.l.b16 %v1810
        %v1843 = vunpack.c.l.b16 %v1811
        %v1844 = vunpack.c.l.b16 %v1812
        %v1845 = vpack.c.b16 %v1830, %v1829
        %v1846 = vpack.c.b16 %v1832, %v1831
        %v1847 = vpack.c.b16 %v1834, %v1833
        %v1848 = vpack.c.b16 %v1836, %v1835
        %v1849 = vpack.c.b16 %v1838, %v1837
        %v1850 = vpack.c.b16 %v1840, %v1839
        %v1851 = vpack.c.b16 %v1842, %v1841
        %v1852 = vpack.c.b16 %v1844, %v1843
        %1861 = vmatprep.subr.bf16.mxu0 0
        %1862 = vmatpush1.bf16.msra.mxu0 %v1845
        %1863 = vmatprep.subr.bf16.mxu0 0
        %1864 = vmatpush1.bf16.msra.mxu0 %v1846
        %1865 = vmatprep.subr.bf16.mxu0 0
        %1866 = vmatpush1.bf16.msra.mxu0 %v1847
        %1867 = vmatprep.subr.bf16.mxu0 0
        %1868 = vmatpush1.bf16.msra.mxu0 %v1848
        %1869 = vmatprep.subr.bf16.mxu0 0
        %1870 = vmatpush1.bf16.msra.mxu0 %v1849
        %1871 = vmatprep.subr.bf16.mxu0 0
        %1872 = vmatpush1.bf16.msra.mxu0 %v1850
        %1873 = vmatprep.subr.bf16.mxu0 0
        %1874 = vmatpush1.bf16.msra.mxu0 %v1851
        %1875 = vmatprep.subr.bf16.mxu0 0
        %1876 = vmatpush1.bf16.msra.mxu0 %v1852
        %1877 = vmatprep.subr.bf16.mxu0 0
        %1878 = vmatpush1.bf16.msra.mxu0 0
        %1879 = vmatprep.subr.bf16.mxu0 0
        %1880 = vmatpush1.bf16.msra.mxu0 0
        %1881 = vmatprep.subr.bf16.mxu0 0
        %1882 = vmatpush1.bf16.msra.mxu0 0
        %1883 = vmatprep.subr.bf16.mxu0 0
        %1884 = vmatpush1.bf16.msra.mxu0 0
        %1885 = vmatprep.subr.bf16.mxu0 0
        %1886 = vmatpush1.bf16.msra.mxu0 0
        %1887 = vmatprep.subr.bf16.mxu0 0
        %1888 = vmatpush1.bf16.msra.mxu0 0
        %1889 = vmatprep.subr.bf16.mxu0 0
        %1890 = vmatpush1.bf16.msra.mxu0 0
        %1891 = vmatprep.subr.bf16.mxu0 0
        %1892 = vmatpush1.bf16.msra.mxu0 0
        %1893 = vmatprep.mubr.bf16.mxu0 0
        %1894 = vmatmul.mubr.bf16.gmra.mrb[0].mxu0 %v1788
        %v1895 = vpop.f32.mrb[0].mxu0
        %v1896 = vadd.f32 0.0, %v1895
        %v1897 = vpop.f32.mrb[0].mxu0
        %v1898 = vpop.f32.mrb[0].mxu0
        %v1899 = vadd.f32 0.0, %v1898
        %v1900 = vpop.f32.mrb[0].mxu0
        %1901 = vmatprep.mubr.bf16.mxu0 0
        %1902 = vmatmul.mubr.bf16.gmra.mrb[0].mxu0 %v1789
        %v1903 = vpop.f32.mrb[0].mxu0
        %v1904 = vadd.f32 0.0, %v1903
        %v1905 = vpop.f32.mrb[0].mxu0
        %v1906 = vpop.f32.mrb[0].mxu0
        %v1907 = vadd.f32 0.0, %v1906
        %v1908 = vpop.f32.mrb[0].mxu0
        %1909 = vmatprep.mubr.bf16.mxu0 0
        %1910 = vmatmul.mubr.bf16.gmra.mrb[0].mxu0 %v1790
        %v1911 = vpop.f32.mrb[0].mxu0
        %v1912 = vadd.f32 0.0, %v1911
        %v1913 = vpop.f32.mrb[0].mxu0
        %v1914 = vpop.f32.mrb[0].mxu0
        %v1915 = vadd.f32 0.0, %v1914
        %v1916 = vpop.f32.mrb[0].mxu0
        %1917 = vmatprep.mubr.bf16.mxu0 0
        %1918 = vmatmul.mubr.bf16.gmra.mrb[0].mxu0 %v1791
        %v1919 = vpop.f32.mrb[0].mxu0
        %v1920 = vadd.f32 0.0, %v1919
        %v1921 = vpop.f32.mrb[0].mxu0
        %v1922 = vpop.f32.mrb[0].mxu0
        %v1923 = vadd.f32 0.0, %v1922
        %v1924 = vpop.f32.mrb[0].mxu0
        %1925 = vmatprep.mubr.bf16.mxu0 0
        %1926 = vmatmul.mubr.bf16.gmra.mrb[0].mxu0 %v1792
        %v1927 = vpop.f32.mrb[0].mxu0
        %v1928 = vadd.f32 0.0, %v1927
        %v1929 = vpop.f32.mrb[0].mxu0
        %v1930 = vpop.f32.mrb[0].mxu0
        %v1931 = vadd.f32 0.0, %v1930
        %v1932 = vpop.f32.mrb[0].mxu0
        %1933 = vmatprep.mubr.bf16.mxu0 0
        %1934 = vmatmul.mubr.bf16.gmra.mrb[0].mxu0 %v1793
        %v1935 = vpop.f32.mrb[0].mxu0
        %v1936 = vadd.f32 0.0, %v1935
        %v1937 = vpop.f32.mrb[0].mxu0
        %v1938 = vpop.f32.mrb[0].mxu0
        %v1939 = vadd.f32 0.0, %v1938
        %v1940 = vpop.f32.mrb[0].mxu0
        %1941 = vmatprep.mubr.bf16.mxu0 0
        %1942 = vmatmul.mubr.bf16.gmra.mrb[0].mxu0 %v1794
        %v1943 = vpop.f32.mrb[0].mxu0
        %v1944 = vadd.f32 0.0, %v1943
        %v1945 = vpop.f32.mrb[0].mxu0
        %v1946 = vpop.f32.mrb[0].mxu0
        %v1947 = vadd.f32 0.0, %v1946
        %v1948 = vpop.f32.mrb[0].mxu0
        %1949 = vmatprep.mubr.bf16.mxu0 0
        %1950 = vmatmul.mubr.bf16.gmra.mrb[0].mxu0 %v1795
        %v1951 = vpop.f32.mrb[0].mxu0
        %v1952 = vadd.f32 0.0, %v1951
        %v1953 = vpop.f32.mrb[0].mxu0
        %v1954 = vpop.f32.mrb[0].mxu0
        %v1955 = vadd.f32 0.0, %v1954
        %v1956 = vpop.f32.mrb[0].mxu0
        %1957 = vdwg.mxu0
        %v1958 = vadd.f32 %v1756, %v1896
        %v1959 = vadd.f32 %v1757, %v1899
        %v1960 = vadd.f32 %v1758, %v1904
        %v1961 = vadd.f32 %v1759, %v1907
        %v1962 = vadd.f32 %v1760, %v1912
        %v1963 = vadd.f32 %v1761, %v1915
        %v1964 = vadd.f32 %v1762, %v1920
        %v1965 = vadd.f32 %v1763, %v1923
        %v1966 = vadd.f32 %v1764, %v1928
        %v1967 = vadd.f32 %v1765, %v1931
        %v1968 = vadd.f32 %v1766, %v1936
        %v1969 = vadd.f32 %v1767, %v1939
        %v1970 = vadd.f32 %v1768, %v1944
        %v1971 = vadd.f32 %v1769, %v1947
        %v1972 = vadd.f32 %v1770, %v1952
        %v1973 = vadd.f32 %v1771, %v1955
        %1974 = vst [vmem:[%s170] sm:$0xff] %v1958
        %1975 = vst [vmem:[%s170 + $0x8] sm:$0xff] %v1959
        %1976 = vst [vmem:[%s170 + $0x10] sm:$0xff] %v1960
        %1977 = vst [vmem:[%s170 + $0x18] sm:$0xff] %v1961
        %1978 = vst [vmem:[%s170 + $0x20] sm:$0xff] %v1962
        %1979 = vst [vmem:[%s170 + $0x28] sm:$0xff] %v1963
        %1980 = vst [vmem:[%s170 + $0x30] sm:$0xff] %v1964
        %1981 = vst [vmem:[%s170 + $0x38] sm:$0xff] %v1965
        %1982 = vst [vmem:[%s170 + $0x40] sm:$0xff] %v1966
        %1983 = vst [vmem:[%s170 + $0x48] sm:$0xff] %v1967
        %1984 = vst [vmem:[%s170 + $0x50] sm:$0xff] %v1968
        %1985 = vst [vmem:[%s170 + $0x58] sm:$0xff] %v1969
        %1986 = vst [vmem:[%s170 + $0x60] sm:$0xff] %v1970
        %1987 = vst [vmem:[%s170 + $0x68] sm:$0xff] %v1971
        %1988 = vst [vmem:[%s170 + $0x70] sm:$0xff] %v1972
        %1989 = vst [vmem:[%s170 + $0x78] sm:$0xff] %v1973
        %v1990 = vadd.f32 %v1958, %v1959
        %v1991 = vadd.f32 %v1990, %v1960
        %v1992 = vadd.f32 %v1991, %v1961
        %v1993 = vadd.f32 %v1992, %v1962
        %v1994 = vadd.f32 %v1993, %v1963
        %v1995 = vadd.f32 %v1994, %v1964
        %v1996 = vadd.f32 %v1995, %v1965
        %v1997 = vadd.f32 %v1996, %v1966
        %v1998 = vadd.f32 %v1997, %v1967
        %v1999 = vadd.f32 %v1998, %v1968
        %v2000 = vadd.f32 %v1999, %v1969
        %v2001 = vadd.f32 %v2000, %v1970
        %v2002 = vadd.f32 %v2001, %v1971
        %v2003 = vadd.f32 %v2002, %v1972
        %v2004 = vadd.f32 %v2003, %v1973
        %v2005 = vrot.slane %v2004, 4
        %v2006 = vadd.f32 %v2004, %v2005
        %v2007 = vrot.slane %v2006, 2
        %v2008 = vadd.f32 %v2006, %v2007
        %v2009 = vrot.slane %v2008, 1
        %v2010 = vadd.f32 %v2008, %v2009
        %v2011 = vmul.f32 %v1958, %v1958
        %v2012 = vmul.f32 %v1959, %v1959
        %v2013 = vmul.f32 %v1960, %v1960
        %v2014 = vmul.f32 %v1961, %v1961
        %v2015 = vmul.f32 %v1962, %v1962
        %v2016 = vmul.f32 %v1963, %v1963
        %v2017 = vmul.f32 %v1964, %v1964
        %v2018 = vmul.f32 %v1965, %v1965
        %v2019 = vmul.f32 %v1966, %v1966
        %v2020 = vmul.f32 %v1967, %v1967
        %v2021 = vmul.f32 %v1968, %v1968
        %v2022 = vmul.f32 %v1969, %v1969
        %v2023 = vmul.f32 %v1970, %v1970
        %v2024 = vmul.f32 %v1971, %v1971
        %v2025 = vmul.f32 %v1972, %v1972
        %v2026 = vmul.f32 %v1973, %v1973
        %v2027 = vadd.f32 %v2011, %v2012
        %v2028 = vadd.f32 %v2027, %v2013
        %v2029 = vadd.f32 %v2028, %v2014
        %v2030 = vadd.f32 %v2029, %v2015
        %v2031 = vadd.f32 %v2030, %v2016
        %v2032 = vadd.f32 %v2031, %v2017
        %v2033 = vadd.f32 %v2032, %v2018
        %v2034 = vadd.f32 %v2033, %v2019
        %v2035 = vadd.f32 %v2034, %v2020
        %v2036 = vadd.f32 %v2035, %v2021
        %v2037 = vadd.f32 %v2036, %v2022
        %v2038 = vadd.f32 %v2037, %v2023
        %v2039 = vadd.f32 %v2038, %v2024
        %v2040 = vadd.f32 %v2039, %v2025
        %v2041 = vadd.f32 %v2040, %v2026
        %v2042 = vrot.slane %v2041, 4
        %v2043 = vadd.f32 %v2041, %v2042
        %v2044 = vrot.slane %v2043, 2
        %v2045 = vadd.f32 %v2043, %v2044
        %v2046 = vrot.slane %v2045, 1
        %v2047 = vadd.f32 %v2045, %v2046
        %vm2048 = vcmask 1040384
        %v2049 = vsel %vm2048, %v2010, %v2047
        %2050 = vst [vmem:[%s177] sm:$0x3] %v2049
        %s2051 = sand.u32 %s76, 1
        %s2052 = scalar_lea.sflag [#allocation3], %s2051
        %s2053 = sand.u32 %s76, 1
        %s2054 = smul.addr %s2053, 128
        %s2055 = scalar_lea.vmem [#allocation2], %s2054
        %s2056 = sand.u32 %s102, 1
        %s2057 = scalar_lea.sflag [#allocation5], %s2056
        %s2058 = sand.u32 %s102, 1
        %s2059 = smul.addr %s2058, 2
        %s2060 = scalar_lea.vmem [#allocation4], %s2059
        // Predicated region
        $region29: #{tpu_custom_call.1} parent=27 // pred_check
          %p2061 = pneg %p86
        $region30: #{tpu_custom_call.1} parent=27 // pred_check_branch
          %2063 = sbr.rel (%p2061) target = $region32
        $region31: #{tpu_custom_call.1} parent=27 // pred_region
          %s2064 = smul.u32 2, %s21
          %s2066 = ssub.s32 2048, 2048
          %2067 = vsyncadd %s2052, %s2066
          %s2068 = smul.addr %s2064, 8
          %s2069 = smul.addr %s2068, 128
          %s2070 = scalar_lea.hbm %s2, %s2069
          %s2071 = sshll.u32 %s2055, 4
          %s2072 = int_to_ptr.vmem [resolvable:$true] %s2071
          %2077 = dma.vmem_to_hbm [thread:$0]  %s2072, 2048, %s2070, %s2052, 128, 128, 8
        $region32: #{tpu_custom_call.1} parent=27 // pred_fallthru
          _
        // Predicated region
        $region33: #{tpu_custom_call.1} parent=27 // pred_check
          %p2078 = pneg %p112
        $region34: #{tpu_custom_call.1} parent=27 // pred_check_branch
          %2080 = sbr.rel (%p2078) target = $region36
        $region35: #{tpu_custom_call.1} parent=27 // pred_region
          %s2082 = ssub.s32 32, 32
          %2083 = vsyncadd %s2057, %s2082
          %s2084 = smul.addr %s21, 32
          %s2085 = scalar_lea.hbm %s3, %s2084
          %s2087 = sshll.u32 %s2060, 4
          %s2088 = int_to_ptr.vmem [resolvable:$true] %s2087
          %2090 = dma.vmem_to_hbm [thread:$0]  %s2088, 32, %s2085, %s2057
        $region36: #{tpu_custom_call.1} parent=27 // pred_fallthru
          _
      $region28: #{tpu_custom_call.1} parent=5 // pred_fallthru
        _
      %p2091 = scmp.le.s32.totalorder 2, %s16
      // Predicated region
      $region37: #{tpu_custom_call.1} parent=5 // pred_check
        %p2092 = pneg %p2091
      $region38: #{tpu_custom_call.1} parent=5 // pred_check_branch
        %2094 = sbr.rel (%p2092) target = $region40
      $region39: #{tpu_custom_call.1} parent=5 // pred_region
        %s2095 = ssub.s32 %s16, 2
        // Predicated region
        $region41: #{tpu_custom_call.1} parent=39 // pred_check
          %p2096 = pneg %p92
        $region42: #{tpu_custom_call.1} parent=39 // pred_check_branch
          %2098 = sbr.rel (%p2096) target = $region44
        $region43: #{tpu_custom_call.1} parent=39 // pred_region
          %s2099 = sand.u32 %s77, 1
          %s2100 = scalar_lea.sflag [#allocation3], %s2099
          %s2101 = sand.u32 %s77, 1
          %s2102 = smul.addr %s2101, 128
          %s2103 = scalar_lea.vmem [#allocation2], %s2102
          %2104 = dma.done %s2100, 2048
        $region44: #{tpu_custom_call.1} parent=39 // pred_fallthru
          _
        // Predicated region
        $region45: #{tpu_custom_call.1} parent=39 // pred_check
          %p2105 = pneg %p118
        $region46: #{tpu_custom_call.1} parent=39 // pred_check_branch
          %2107 = sbr.rel (%p2105) target = $region48
        $region47: #{tpu_custom_call.1} parent=39 // pred_region
          %s2108 = sand.u32 %s103, 1
          %s2109 = scalar_lea.sflag [#allocation5], %s2108
          %s2110 = sand.u32 %s103, 1
          %s2111 = smul.addr %s2110, 2
          %s2112 = scalar_lea.vmem [#allocation4], %s2111
          %2113 = dma.done %s2109, 32
        $region48: #{tpu_custom_call.1} parent=39 // pred_fallthru
          _
      $region40: #{tpu_custom_call.1} parent=5 // pred_fallthru
        _
    $region6: #{tpu_custom_call.1} parent=1 // loop_footer
      %s20 = sadd.s32 1, %s16
    $region7: #{tpu_custom_call.1} parent=1 // loop_footer_branch
      %15 = sbr.rel target = $region3
    $region8: #{tpu_custom_call.1} parent=1 // loop_exit
      _
    %2114 = vsyncpa [#allocation3], 1
    %s2115 = scalar_lea.sflag [#allocation3], 1
    %2116 = vsyncpa %s2115, 1
    %2117 = vsyncpa [#allocation5], 1
    %s2118 = scalar_lea.sflag [#allocation5], 1
    %2119 = vsyncpa %s2118, 1

</llo_original>
